<compile_context>
chip_gen: v7x
topology: tpu7x:2x2x1
jax: 0.10.0
libtpu: 0.0.40
codegen_flags: <defaults>
</compile_context>

<pallas_src>
import functools
import math

import jax
import jax.numpy as jnp
from jax.experimental import pallas as pl
from jax.experimental.pallas import tpu as pltpu

LANE = 128
_GATE_PERM = (0, 1, 3, 2)  # PyTorch LSTM packs (i, f, g, o); reorder -> (i, f, o, g)


def _round_up(x, m):
    return ((x + m - 1) // m) * m


def _pad_reorder_gate_rows(w, H, Hp):
    """(4H, K) -> (4Hp, K): gate-reorder to (i,f,o,g), zero-pad each gate's H rows to Hp."""
    w4 = w.reshape(4, H, -1)[jnp.array(_GATE_PERM)]
    w4 = jnp.pad(w4, ((0, 0), (0, Hp - H), (0, 0)))
    return w4.reshape(4 * Hp, -1)


# ----------------------------------------------------------------------------
# Fused LSTM-recurrence + doc_len-select + prediction-head kernel.
# Grid axis = time chunks (sequential recurrence -> "arbitrary").
# ----------------------------------------------------------------------------
def _lstm_head_kernel(last_ref, doc_ref, gates_ref, w_hh_ref, pred_w_ref,
                      pred_b_ref, out_ref, h_sc, c_sc, hid_sc,
                      *, t_chunk, batch, hidden_pad):
    """
    last_ref  : (1,) int32 SMEM        index of last chunk containing any doc_len
    doc_ref   : (B, 1) int32           doc_len (VMEM, for vectorized compare)
    gates_ref : (t_chunk*B, 4*Hp) f32  precomputed input projection + bias
                                       (time-major rows, lane/sublane-dense)
    w_hh_ref  : (Hp, 4*Hp)             recurrent weight, transposed, gate-padded
    pred_w_ref: (Hp, Op)  f32          prediction weight, transposed, padded
    pred_b_ref: (1, Op)   f32
    out_ref   : (B, Op)   f32          logits, written on the last grid step
    h_sc/c_sc/hid_sc : (B, Hp) f32     persistent state across grid steps
    """
    s = pl.program_id(0)
    Hp = hidden_pad
    B = batch

    @pl.when(s == 0)
    def _():
        h_sc[...] = jnp.zeros_like(h_sc)
        c_sc[...] = jnp.zeros_like(c_sc)
        hid_sc[...] = jnp.zeros_like(hid_sc)

    # Skip all recurrence work past the chunk containing max(doc_len).
    @pl.when(s <= last_ref[0])
    def _():
        w_hh_t = w_hh_ref[...]        # loop-invariant RHS, hoisted out of the unroll
        doc = doc_ref[...]            # (B, 1) int32
        t_base = s * t_chunk

        h = h_sc[...]
        c = c_sc[...]
        hid = hid_sc[...]

        # Statically unrolled inner time loop (t_chunk is a small Python const):
        # only the tiny (B, Hp) x (Hp, 4Hp) recurrent matmul is on the serial path.
        for t_local in range(t_chunk):
            g_in = gates_ref[pl.ds(t_local * B, B), :]              # (B, 4Hp) static slice
            gates = g_in + jnp.dot(h.astype(w_hh_t.dtype), w_hh_t,
                                   preferred_element_type=jnp.float32)
            # gate order (i, f, o, g): one contiguous sigmoid span + one tanh
            acts = jax.nn.sigmoid(gates[:, :3 * Hp])
            i_g = acts[:, 0 * Hp:1 * Hp]
            f_g = acts[:, 1 * Hp:2 * Hp]
            o_g = acts[:, 2 * Hp:3 * Hp]
            g_g = jnp.tanh(gates[:, 3 * Hp:4 * Hp])
            c = f_g * c + i_g * g_g
            h = o_g * jnp.tanh(c)
            # fused doc_len gather: capture h at t == doc_len[b]
            sel = doc == (t_base + t_local)                          # (B, 1) bool
            hid = jnp.where(sel, h, hid)

        h_sc[...] = h
        c_sc[...] = c
        hid_sc[...] = hid

    @pl.when(s == pl.num_programs(0) - 1)
    def _():
        out_ref[...] = (
            jnp.dot(hid_sc[...], pred_w_ref[...],
                    preferred_element_type=jnp.float32)
            + pred_b_ref[...]
        ).astype(out_ref.dtype)


# ----------------------------------------------------------------------------
# Predictor wrapper (hard=True)
# ----------------------------------------------------------------------------
def init_params(key, n_class, out_class, z_size, hidden_size):
    D = n_class + z_size
    ks = jax.random.split(key, 7)
    scale = 1.0 / jnp.sqrt(hidden_size)
    return {
        "embedding_w": jax.random.uniform(ks[0], (hidden_size, n_class),
                                          jnp.float32, -scale, scale),
        "w_ih": jax.random.uniform(ks[1], (4 * hidden_size, D),
                                   jnp.float32, -scale, scale),
        "w_hh": jax.random.uniform(ks[2], (4 * hidden_size, hidden_size),
                                   jnp.float32, -scale, scale),
        "b_ih": jax.random.uniform(ks[3], (4 * hidden_size,),
                                   jnp.float32, -scale, scale),
        "b_hh": jax.random.uniform(ks[4], (4 * hidden_size,),
                                   jnp.float32, -scale, scale),
        "pred_w": jax.random.uniform(ks[5], (out_class, hidden_size),
                                     jnp.float32, -scale, scale),
        "pred_b": jax.random.uniform(ks[6], (out_class,),
                                     jnp.float32, -scale, scale),
    }


def predictor_forward(params, x, z, doc_len, *, hidden_size, out_class,
                      t_chunk=16, recurrent_dtype=jnp.bfloat16):
    B, S, n_class = x.shape
    H = hidden_size
    Hp = _round_up(H, LANE)            # lane-dense hidden width
    Op = _round_up(out_class, LANE)    # lane-dense logits width

    # Chunk granularity so the flattened (t_chunk*B, 4Hp) gates block stays
    # sublane-dense (rows % 8 == 0), without exceeding the (padded) sequence.
    step = math.lcm(8, B) // B
    t_chunk = max(step, (min(t_chunk, 32) // step) * step)
    t_chunk = min(t_chunk, _round_up(S, step))
    rows = t_chunk * B
    num_chunks = (S + t_chunk - 1) // t_chunk
    S_pad = num_chunks * t_chunk

    # ---- weight preprocessing (padding keeps padded hidden units exactly 0) --
    w_ih_pad = _pad_reorder_gate_rows(params["w_ih"], H, Hp)       # (4Hp, D)
    w_hh_pad = _pad_reorder_gate_rows(params["w_hh"], H, Hp)       # (4Hp, H)
    w_hh_pad = jnp.pad(w_hh_pad, ((0, 0), (0, Hp - H)))            # (4Hp, Hp)
    w_hh_t = w_hh_pad.T.astype(recurrent_dtype)                    # (Hp, 4Hp)

    bias = (params["b_ih"] + params["b_hh"]).reshape(4, H)
    bias = bias[jnp.array(_GATE_PERM)]
    bias = jnp.pad(bias, ((0, 0), (0, Hp - H))).reshape(4 * Hp)

    pred_w_t = jnp.pad(params["pred_w"].T,
                       ((0, Hp - H), (0, Op - out_class)))         # (Hp, Op)
    pred_b = jnp.pad(params["pred_b"], (0, Op - out_class)).reshape(1, Op)

    # ---- hoisted, time-independent input projection: ONE big MXU matmul ------
    # Concat is cheap (D = n_class + z_size is tiny); a single einsum avoids a
    # second full-size (S, B, 4Hp) intermediate + elementwise pass.
    xz = jnp.concatenate([x, z], axis=2)                           # (B, S, D)
    gates_in = jnp.einsum("bsd,gd->sbg", xz, w_ih_pad) + bias      # (S, B, 4Hp) f32
    if S_pad != S:
        # zero-padded trailing steps are harmless: doc_len < S so the selected
        # hidden has already been captured.
        gates_in = jnp.pad(gates_in, ((0, S_pad - S), (0, 0), (0, 0)))
    # Flatten to a lane/sublane-dense 2D slab: rows ordered (t0 b0, t0 b1, t1 b0, ...)
    gates_in = gates_in.reshape(S_pad * B, 4 * Hp)

    # doc_len semantics follow the PyTorch module: output[arange(B), doc_len],
    # i.e. doc_len must lie in [0, S-1].
    doc2 = doc_len.reshape(B, 1).astype(jnp.int32)
    # Last chunk that contains any doc_len capture -> everything past it is skipped.
    last_chunk = (jnp.max(doc_len).astype(jnp.int32) // t_chunk).reshape(1)

    kernel = functools.partial(_lstm_head_kernel, t_chunk=t_chunk,
                               batch=B, hidden_pad=Hp)
    logits_pad = pl.pallas_call(
        kernel,
        out_shape=jax.ShapeDtypeStruct((B, Op), jnp.float32),
        grid_spec=pltpu.PrefetchScalarGridSpec(
            num_scalar_prefetch=1,                     # last_chunk -> SMEM
            grid=(num_chunks,),
            in_specs=[
                pl.BlockSpec((B, 1), lambda s, last: (0, 0)),              # doc_len
                # gates chunk: clamp the index past last_chunk so dead chunks
                # re-use the same block and issue no new DMAs.
                pl.BlockSpec((rows, 4 * Hp),
                             lambda s, last: (jnp.minimum(s, last[0]), 0)),
                pl.BlockSpec((Hp, 4 * Hp), lambda s, last: (0, 0)),        # W_hh^T
                pl.BlockSpec((Hp, Op), lambda s, last: (0, 0)),            # W_pred^T
                pl.BlockSpec((1, Op), lambda s, last: (0, 0)),             # b_pred
            ],
            out_specs=pl.BlockSpec((B, Op), lambda s, last: (0, 0)),
            scratch_shapes=[
                pltpu.VMEM((B, Hp), jnp.float32),     # h state
                pltpu.VMEM((B, Hp), jnp.float32),     # c state
                pltpu.VMEM((B, Hp), jnp.float32),     # selected hidden
            ],
        ),
        compiler_params=pltpu.CompilerParams(
            dimension_semantics=("arbitrary",)),      # recurrence => sequential
    )(last_chunk, doc2, gates_in, w_hh_t, pred_w_t, pred_b)

    return logits_pad[:, :out_class], params["embedding_w"]


# ----------------------------------------------------------------------------
# Pure-JAX reference (for validation)
# ----------------------------------------------------------------------------
def predictor_reference(params, x, z, doc_len, hidden_size):
    B, S, _ = x.shape
    H = hidden_size
    xz = jnp.concatenate([x, z], axis=2)
    w_ih_t, w_hh_t = params["w_ih"].T, params["w_hh"].T
    bias = params["b_ih"] + params["b_hh"]

    def step(carry, x_t):
        h, c = carry
        g = x_t @ w_ih_t + h @ w_hh_t + bias
        i = jax.nn.sigmoid(g[:, 0 * H:1 * H])
        f = jax.nn.sigmoid(g[:, 1 * H:2 * H])
        gg = jnp.tanh(g[:, 2 * H:3 * H])
        o = jax.nn.sigmoid(g[:, 3 * H:4 * H])
        c = f * c + i * gg
        h = o * jnp.tanh(c)
        return (h, c), h

    h0 = jnp.zeros((B, H), jnp.float32)
    (_, _), out_tm = jax.lax.scan(step, (h0, h0), jnp.transpose(xz, (1, 0, 2)))
    hidden = out_tm[doc_len.reshape(-1), jnp.arange(B)]
    logits = hidden @ params["pred_w"].T + params["pred_b"]
    return logits, params["embedding_w"]


if __name__ == "__main__":
    # Small shapes consistent with the module's forward.
    n_class, out_class, z_size = 4, 4, 4
    hidden_size = 32
    B, S = 2, 8

    key = jax.random.PRNGKey(0)
    kp, kx, kz, kd = jax.random.split(key, 4)
    params = init_params(kp, n_class, out_class, z_size, hidden_size)

    x = jax.random.normal(kx, (B, S, n_class), jnp.float32)
    z = jax.random.normal(kz, (B, S, z_size), jnp.float32)
    doc_len = jax.random.randint(kd, (B,), 0, S, jnp.int32)

    fwd_bf16 = jax.jit(functools.partial(predictor_forward,
                                         hidden_size=hidden_size,
                                         out_class=out_class,
                                         recurrent_dtype=jnp.bfloat16))
    fwd_f32 = jax.jit(functools.partial(predictor_forward,
                                        hidden_size=hidden_size,
                                        out_class=out_class,
                                        recurrent_dtype=jnp.float32))

    logits_bf16, emb_w = fwd_bf16(params, x, z, doc_len)
    logits_f32, _ = fwd_f32(params, x, z, doc_len)
    jax.block_until_ready((logits_bf16, logits_f32, emb_w))

    ref_logits, ref_emb = predictor_reference(params, x, z, doc_len, hidden_size)
    assert logits_bf16.shape == (B, out_class)
    assert emb_w.shape == (hidden_size, n_class)
    # f32 recurrence matches the reference tightly.
    assert jnp.allclose(logits_f32, ref_logits, atol=1e-4, rtol=1e-4)
    # bf16 recurrent-matmul operands (f32 accumulation): looser tolerance.
    assert jnp.allclose(logits_bf16, ref_logits, atol=2e-2, rtol=2e-2)
    assert jnp.allclose(emb_w, ref_emb)

    print("KERNEL_OK")
</pallas_src>

<mosaic_0001>
module attributes {stable_mosaic.version = 11 : i64} {
  func.func @_lstm_head_kernel(%arg0: i32, %arg1: memref<1xi32, #tpu.memory_space<smem>>, %arg2: memref<2x1xi32, #tpu.memory_space<vmem>>, %arg3: memref<16x512xf32, #tpu.memory_space<vmem>>, %arg4: memref<128x512xbf16, #tpu.memory_space<vmem>>, %arg5: memref<128x128xf32, #tpu.memory_space<vmem>>, %arg6: memref<1x128xf32, #tpu.memory_space<vmem>>, %arg7: memref<2x128xf32, #tpu.memory_space<vmem>>, %arg8: memref<2x128xf32, #tpu.memory_space<vmem>>, %arg9: memref<2x128xf32, #tpu.memory_space<vmem>>, %arg10: memref<2x128xf32, #tpu.memory_space<vmem>>) attributes {dimension_semantics = [#tpu.dimension_semantics<arbitrary>], iteration_bounds = array<i64: 1>, scalar_prefetch = 1 : i64, scratch_operands = 3 : i64, tpu.core_type = #tpu.core_type<tc>, window_params = [{pipeline_mode = #tpu.pipeline_mode<synchronous>, transform_indices = @transform_0, window_bounds = array<i64: 2, 1>}, {transform_indices = @transform_1, window_bounds = array<i64: 16, 512>}, {pipeline_mode = #tpu.pipeline_mode<synchronous>, transform_indices = @transform_2, window_bounds = array<i64: 128, 512>}, {pipeline_mode = #tpu.pipeline_mode<synchronous>, transform_indices = @transform_3, window_bounds = array<i64: 128, 128>}, {pipeline_mode = #tpu.pipeline_mode<synchronous>, transform_indices = @transform_4, window_bounds = array<i64: 1, 128>}, {pipeline_mode = #tpu.pipeline_mode<synchronous>, transform_indices = @transform_5, window_bounds = array<i64: 2, 128>}]} {
    %c0_i32 = arith.constant 0 : i32
    %0 = arith.cmpi eq, %arg0, %c0_i32 : i32
    %1 = arith.extui %0 : i1 to i32
    %c0_i32_0 = arith.constant 0 : i32
    %2 = arith.cmpi ne, %1, %c0_i32_0 : i32
    scf.if %2 {
      %cst = arith.constant 0.000000e+00 : f32
      %10 = vector.broadcast %cst : f32 to vector<2x128xf32>
      %c0_4 = arith.constant 0 : index
      %c0_5 = arith.constant 0 : index
      %11 = vector.load %arg8[%c0_4, %c0_5] : memref<2x128xf32, #tpu.memory_space<vmem>>, vector<2x128xf32>
      tpu.vector_store %arg8[%c0_4, %c0_5], %10 {strides = array<i32>} : memref<2x128xf32, #tpu.memory_space<vmem>>, vector<2x128xf32>,
      %cst_6 = arith.constant 0.000000e+00 : f32
      %12 = vector.broadcast %cst_6 : f32 to vector<2x128xf32>
      %c0_7 = arith.constant 0 : index
      %c0_8 = arith.constant 0 : index
      %13 = vector.load %arg9[%c0_7, %c0_8] : memref<2x128xf32, #tpu.memory_space<vmem>>, vector<2x128xf32>
      tpu.vector_store %arg9[%c0_7, %c0_8], %12 {strides = array<i32>} : memref<2x128xf32, #tpu.memory_space<vmem>>, vector<2x128xf32>,
      %cst_9 = arith.constant 0.000000e+00 : f32
      %14 = vector.broadcast %cst_9 : f32 to vector<2x128xf32>
      %c0_10 = arith.constant 0 : index
      %c0_11 = arith.constant 0 : index
      %15 = vector.load %arg10[%c0_10, %c0_11] : memref<2x128xf32, #tpu.memory_space<vmem>>, vector<2x128xf32>
      tpu.vector_store %arg10[%c0_10, %c0_11], %14 {strides = array<i32>} : memref<2x128xf32, #tpu.memory_space<vmem>>, vector<2x128xf32>,
    } else {
    }
    %c0 = arith.constant 0 : index
    %3 = memref.load %arg1[%c0] : memref<1xi32, #tpu.memory_space<smem>>
    %4 = arith.cmpi sle, %arg0, %3 : i32
    %5 = arith.extui %4 : i1 to i32
    %c0_i32_1 = arith.constant 0 : i32
    %6 = arith.cmpi ne, %5, %c0_i32_1 : i32
    scf.if %6 {
      %c0_4 = arith.constant 0 : index
      %c0_5 = arith.constant 0 : index
      %10 = vector.load %arg4[%c0_4, %c0_5] : memref<128x512xbf16, #tpu.memory_space<vmem>>, vector<128x512xbf16>
      %c0_6 = arith.constant 0 : index
      %c0_7 = arith.constant 0 : index
      %11 = vector.load %arg2[%c0_6, %c0_7] : memref<2x1xi32, #tpu.memory_space<vmem>>, vector<2x1xi32>
      %c8_i32 = arith.constant 8 : i32
      %12 = arith.muli %arg0, %c8_i32 : i32
      %c0_8 = arith.constant 0 : index
      %c0_9 = arith.constant 0 : index
      %13 = vector.load %arg8[%c0_8, %c0_9] : memref<2x128xf32, #tpu.memory_space<vmem>>, vector<2x128xf32>
      %c0_10 = arith.constant 0 : index
      %c0_11 = arith.constant 0 : index
      %14 = vector.load %arg9[%c0_10, %c0_11] : memref<2x128xf32, #tpu.memory_space<vmem>>, vector<2x128xf32>
      %c0_12 = arith.constant 0 : index
      %c0_13 = arith.constant 0 : index
      %15 = vector.load %arg10[%c0_12, %c0_13] : memref<2x128xf32, #tpu.memory_space<vmem>>, vector<2x128xf32>
      %c0_14 = arith.constant 0 : index
      %c0_15 = arith.constant 0 : index
      %16 = vector.load %arg3[%c0_14, %c0_15] : memref<16x512xf32, #tpu.memory_space<vmem>>, vector<2x512xf32>
      %17 = arith.truncf %13 : vector<2x128xf32> to vector<2x128xbf16>
      %cst = arith.constant dense<0.000000e+00> : vector<2x512xf32>
      %18 = tpu.matmul %17, %10, %cst {dimension_numbers = #tpu.dot_dimension_numbers<[1], [0], [0], [1], [0, 0, 1, 1], [], []>} : vector<2x128xbf16>, vector<128x512xbf16>, vector<2x512xf32> -> vector<2x512xf32>
      %19 = arith.addf %16, %18 : vector<2x512xf32>
      %20 = vector.extract_strided_slice %19 {offsets = [0, 0], sizes = [2, 384], strides = [1, 1]} : vector<2x512xf32> to vector<2x384xf32>
      %21 = arith.negf %20 : vector<2x384xf32>
      %22 = math.exp %21 : vector<2x384xf32>
      %cst_16 = arith.constant 1.000000e+00 : f32
      %23 = vector.broadcast %cst_16 : f32 to vector<2x384xf32>
      %24 = arith.addf %23, %22 : vector<2x384xf32>
      %25 = arith.divf %23, %24 : vector<2x384xf32>
      %26 = vector.extract_strided_slice %25 {offsets = [0, 0], sizes = [2, 128], strides = [1, 1]} : vector<2x384xf32> to vector<2x128xf32>
      %27 = vector.extract_strided_slice %25 {offsets = [0, 128], sizes = [2, 128], strides = [1, 1]} : vector<2x384xf32> to vector<2x128xf32>
      %28 = vector.extract_strided_slice %25 {offsets = [0, 256], sizes = [2, 128], strides = [1, 1]} : vector<2x384xf32> to vector<2x128xf32>
      %29 = vector.extract_strided_slice %19 {offsets = [0, 384], sizes = [2, 128], strides = [1, 1]} : vector<2x512xf32> to vector<2x128xf32>
      %30 = math.tanh %29 : vector<2x128xf32>
      %31 = arith.mulf %27, %14 : vector<2x128xf32>
      %32 = arith.mulf %26, %30 : vector<2x128xf32>
      %33 = arith.addf %31, %32 : vector<2x128xf32>
      %34 = math.tanh %33 : vector<2x128xf32>
      %35 = arith.mulf %28, %34 : vector<2x128xf32>
      %c0_i32_17 = arith.constant 0 : i32
      %36 = arith.addi %12, %c0_i32_17 : i32
      %37 = vector.broadcast %36 : i32 to vector<2x1xi32>
      %38 = arith.cmpi eq, %11, %37 : vector<2x1xi32>
      %39 = vector.shape_cast %38 : vector<2x1xi1> to vector<2x1xi1>
      %40 = vector.broadcast %39 : vector<2x1xi1> to vector<2x128xi1>
      %41 = arith.select %40, %35, %15 : vector<2x128xi1>, vector<2x128xf32>
      %c2 = arith.constant 2 : index
      %c0_18 = arith.constant 0 : index
      %42 = vector.load %arg3[%c2, %c0_18] : memref<16x512xf32, #tpu.memory_space<vmem>>, vector<2x512xf32>
      %43 = arith.truncf %35 : vector<2x128xf32> to vector<2x128xbf16>
      %cst_19 = arith.constant dense<0.000000e+00> : vector<2x512xf32>
      %44 = tpu.matmul %43, %10, %cst_19 {dimension_numbers = #tpu.dot_dimension_numbers<[1], [0], [0], [1], [0, 0, 1, 1], [], []>} : vector<2x128xbf16>, vector<128x512xbf16>, vector<2x512xf32> -> vector<2x512xf32>
      %45 = arith.addf %42, %44 : vector<2x512xf32>
      %46 = vector.extract_strided_slice %45 {offsets = [0, 0], sizes = [2, 384], strides = [1, 1]} : vector<2x512xf32> to vector<2x384xf32>
      %47 = arith.negf %46 : vector<2x384xf32>
      %48 = math.exp %47 : vector<2x384xf32>
      %cst_20 = arith.constant 1.000000e+00 : f32
      %49 = vector.broadcast %cst_20 : f32 to vector<2x384xf32>
      %50 = arith.addf %49, %48 : vector<2x384xf32>
      %51 = arith.divf %49, %50 : vector<2x384xf32>
      %52 = vector.extract_strided_slice %51 {offsets = [0, 0], sizes = [2, 128], strides = [1, 1]} : vector<2x384xf32> to vector<2x128xf32>
      %53 = vector.extract_strided_slice %51 {offsets = [0, 128], sizes = [2, 128], strides = [1, 1]} : vector<2x384xf32> to vector<2x128xf32>
      %54 = vector.extract_strided_slice %51 {offsets = [0, 256], sizes = [2, 128], strides = [1, 1]} : vector<2x384xf32> to vector<2x128xf32>
      %55 = vector.extract_strided_slice %45 {offsets = [0, 384], sizes = [2, 128], strides = [1, 1]} : vector<2x512xf32> to vector<2x128xf32>
      %56 = math.tanh %55 : vector<2x128xf32>
      %57 = arith.mulf %53, %33 : vector<2x128xf32>
      %58 = arith.mulf %52, %56 : vector<2x128xf32>
      %59 = arith.addf %57, %58 : vector<2x128xf32>
      %60 = math.tanh %59 : vector<2x128xf32>
      %61 = arith.mulf %54, %60 : vector<2x128xf32>
      %c1_i32 = arith.constant 1 : i32
      %62 = arith.addi %12, %c1_i32 : i32
      %63 = vector.broadcast %62 : i32 to vector<2x1xi32>
      %64 = arith.cmpi eq, %11, %63 : vector<2x1xi32>
      %65 = vector.shape_cast %64 : vector<2x1xi1> to vector<2x1xi1>
      %66 = vector.broadcast %65 : vector<2x1xi1> to vector<2x128xi1>
      %67 = arith.select %66, %61, %41 : vector<2x128xi1>, vector<2x128xf32>
      %c4 = arith.constant 4 : index
      %c0_21 = arith.constant 0 : index
      %68 = vector.load %arg3[%c4, %c0_21] : memref<16x512xf32, #tpu.memory_space<vmem>>, vector<2x512xf32>
      %69 = arith.truncf %61 : vector<2x128xf32> to vector<2x128xbf16>
      %cst_22 = arith.constant dense<0.000000e+00> : vector<2x512xf32>
      %70 = tpu.matmul %69, %10, %cst_22 {dimension_numbers = #tpu.dot_dimension_numbers<[1], [0], [0], [1], [0, 0, 1, 1], [], []>} : vector<2x128xbf16>, vector<128x512xbf16>, vector<2x512xf32> -> vector<2x512xf32>
      %71 = arith.addf %68, %70 : vector<2x512xf32>
      %72 = vector.extract_strided_slice %71 {offsets = [0, 0], sizes = [2, 384], strides = [1, 1]} : vector<2x512xf32> to vector<2x384xf32>
      %73 = arith.negf %72 : vector<2x384xf32>
      %74 = math.exp %73 : vector<2x384xf32>
      %cst_23 = arith.constant 1.000000e+00 : f32
      %75 = vector.broadcast %cst_23 : f32 to vector<2x384xf32>
      %76 = arith.addf %75, %74 : vector<2x384xf32>
      %77 = arith.divf %75, %76 : vector<2x384xf32>
      %78 = vector.extract_strided_slice %77 {offsets = [0, 0], sizes = [2, 128], strides = [1, 1]} : vector<2x384xf32> to vector<2x128xf32>
      %79 = vector.extract_strided_slice %77 {offsets = [0, 128], sizes = [2, 128], strides = [1, 1]} : vector<2x384xf32> to vector<2x128xf32>
      %80 = vector.extract_strided_slice %77 {offsets = [0, 256], sizes = [2, 128], strides = [1, 1]} : vector<2x384xf32> to vector<2x128xf32>
      %81 = vector.extract_strided_slice %71 {offsets = [0, 384], sizes = [2, 128], strides = [1, 1]} : vector<2x512xf32> to vector<2x128xf32>
      %82 = math.tanh %81 : vector<2x128xf32>
      %83 = arith.mulf %79, %59 : vector<2x128xf32>
      %84 = arith.mulf %78, %82 : vector<2x128xf32>
      %85 = arith.addf %83, %84 : vector<2x128xf32>
      %86 = math.tanh %85 : vector<2x128xf32>
      %87 = arith.mulf %80, %86 : vector<2x128xf32>
      %c2_i32 = arith.constant 2 : i32
      %88 = arith.addi %12, %c2_i32 : i32
      %89 = vector.broadcast %88 : i32 to vector<2x1xi32>
      %90 = arith.cmpi eq, %11, %89 : vector<2x1xi32>
      %91 = vector.shape_cast %90 : vector<2x1xi1> to vector<2x1xi1>
      %92 = vector.broadcast %91 : vector<2x1xi1> to vector<2x128xi1>
      %93 = arith.select %92, %87, %67 : vector<2x128xi1>, vector<2x128xf32>
      %c6 = arith.constant 6 : index
      %c0_24 = arith.constant 0 : index
      %94 = vector.load %arg3[%c6, %c0_24] : memref<16x512xf32, #tpu.memory_space<vmem>>, vector<2x512xf32>
      %95 = arith.truncf %87 : vector<2x128xf32> to vector<2x128xbf16>
      %cst_25 = arith.constant dense<0.000000e+00> : vector<2x512xf32>
      %96 = tpu.matmul %95, %10, %cst_25 {dimension_numbers = #tpu.dot_dimension_numbers<[1], [0], [0], [1], [0, 0, 1, 1], [], []>} : vector<2x128xbf16>, vector<128x512xbf16>, vector<2x512xf32> -> vector<2x512xf32>
      %97 = arith.addf %94, %96 : vector<2x512xf32>
      %98 = vector.extract_strided_slice %97 {offsets = [0, 0], sizes = [2, 384], strides = [1, 1]} : vector<2x512xf32> to vector<2x384xf32>
      %99 = arith.negf %98 : vector<2x384xf32>
      %100 = math.exp %99 : vector<2x384xf32>
      %cst_26 = arith.constant 1.000000e+00 : f32
      %101 = vector.broadcast %cst_26 : f32 to vector<2x384xf32>
      %102 = arith.addf %101, %100 : vector<2x384xf32>
      %103 = arith.divf %101, %102 : vector<2x384xf32>
      %104 = vector.extract_strided_slice %103 {offsets = [0, 0], sizes = [2, 128], strides = [1, 1]} : vector<2x384xf32> to vector<2x128xf32>
      %105 = vector.extract_strided_slice %103 {offsets = [0, 128], sizes = [2, 128], strides = [1, 1]} : vector<2x384xf32> to vector<2x128xf32>
      %106 = vector.extract_strided_slice %103 {offsets = [0, 256], sizes = [2, 128], strides = [1, 1]} : vector<2x384xf32> to vector<2x128xf32>
      %107 = vector.extract_strided_slice %97 {offsets = [0, 384], sizes = [2, 128], strides = [1, 1]} : vector<2x512xf32> to vector<2x128xf32>
      %108 = math.tanh %107 : vector<2x128xf32>
      %109 = arith.mulf %105, %85 : vector<2x128xf32>
      %110 = arith.mulf %104, %108 : vector<2x128xf32>
      %111 = arith.addf %109, %110 : vector<2x128xf32>
      %112 = math.tanh %111 : vector<2x128xf32>
      %113 = arith.mulf %106, %112 : vector<2x128xf32>
      %c3_i32 = arith.constant 3 : i32
      %114 = arith.addi %12, %c3_i32 : i32
      %115 = vector.broadcast %114 : i32 to vector<2x1xi32>
      %116 = arith.cmpi eq, %11, %115 : vector<2x1xi32>
      %117 = vector.shape_cast %116 : vector<2x1xi1> to vector<2x1xi1>
      %118 = vector.broadcast %117 : vector<2x1xi1> to vector<2x128xi1>
      %119 = arith.select %118, %113, %93 : vector<2x128xi1>, vector<2x128xf32>
      %c8 = arith.constant 8 : index
      %c0_27 = arith.constant 0 : index
      %120 = vector.load %arg3[%c8, %c0_27] : memref<16x512xf32, #tpu.memory_space<vmem>>, vector<2x512xf32>
      %121 = arith.truncf %113 : vector<2x128xf32> to vector<2x128xbf16>
      %cst_28 = arith.constant dense<0.000000e+00> : vector<2x512xf32>
      %122 = tpu.matmul %121, %10, %cst_28 {dimension_numbers = #tpu.dot_dimension_numbers<[1], [0], [0], [1], [0, 0, 1, 1], [], []>} : vector<2x128xbf16>, vector<128x512xbf16>, vector<2x512xf32> -> vector<2x512xf32>
      %123 = arith.addf %120, %122 : vector<2x512xf32>
      %124 = vector.extract_strided_slice %123 {offsets = [0, 0], sizes = [2, 384], strides = [1, 1]} : vector<2x512xf32> to vector<2x384xf32>
      %125 = arith.negf %124 : vector<2x384xf32>
      %126 = math.exp %125 : vector<2x384xf32>
      %cst_29 = arith.constant 1.000000e+00 : f32
      %127 = vector.broadcast %cst_29 : f32 to vector<2x384xf32>
      %128 = arith.addf %127, %126 : vector<2x384xf32>
      %129 = arith.divf %127, %128 : vector<2x384xf32>
      %130 = vector.extract_strided_slice %129 {offsets = [0, 0], sizes = [2, 128], strides = [1, 1]} : vector<2x384xf32> to vector<2x128xf32>
      %131 = vector.extract_strided_slice %129 {offsets = [0, 128], sizes = [2, 128], strides = [1, 1]} : vector<2x384xf32> to vector<2x128xf32>
      %132 = vector.extract_strided_slice %129 {offsets = [0, 256], sizes = [2, 128], strides = [1, 1]} : vector<2x384xf32> to vector<2x128xf32>
      %133 = vector.extract_strided_slice %123 {offsets = [0, 384], sizes = [2, 128], strides = [1, 1]} : vector<2x512xf32> to vector<2x128xf32>
      %134 = math.tanh %133 : vector<2x128xf32>
      %135 = arith.mulf %131, %111 : vector<2x128xf32>
      %136 = arith.mulf %130, %134 : vector<2x128xf32>
      %137 = arith.addf %135, %136 : vector<2x128xf32>
      %138 = math.tanh %137 : vector<2x128xf32>
      %139 = arith.mulf %132, %138 : vector<2x128xf32>
      %c4_i32 = arith.constant 4 : i32
      %140 = arith.addi %12, %c4_i32 : i32
      %141 = vector.broadcast %140 : i32 to vector<2x1xi32>
      %142 = arith.cmpi eq, %11, %141 : vector<2x1xi32>
      %143 = vector.shape_cast %142 : vector<2x1xi1> to vector<2x1xi1>
      %144 = vector.broadcast %143 : vector<2x1xi1> to vector<2x128xi1>
      %145 = arith.select %144, %139, %119 : vector<2x128xi1>, vector<2x128xf32>
      %c10 = arith.constant 10 : index
      %c0_30 = arith.constant 0 : index
      %146 = vector.load %arg3[%c10, %c0_30] : memref<16x512xf32, #tpu.memory_space<vmem>>, vector<2x512xf32>
      %147 = arith.truncf %139 : vector<2x128xf32> to vector<2x128xbf16>
      %cst_31 = arith.constant dense<0.000000e+00> : vector<2x512xf32>
      %148 = tpu.matmul %147, %10, %cst_31 {dimension_numbers = #tpu.dot_dimension_numbers<[1], [0], [0], [1], [0, 0, 1, 1], [], []>} : vector<2x128xbf16>, vector<128x512xbf16>, vector<2x512xf32> -> vector<2x512xf32>
      %149 = arith.addf %146, %148 : vector<2x512xf32>
      %150 = vector.extract_strided_slice %149 {offsets = [0, 0], sizes = [2, 384], strides = [1, 1]} : vector<2x512xf32> to vector<2x384xf32>
      %151 = arith.negf %150 : vector<2x384xf32>
      %152 = math.exp %151 : vector<2x384xf32>
      %cst_32 = arith.constant 1.000000e+00 : f32
      %153 = vector.broadcast %cst_32 : f32 to vector<2x384xf32>
      %154 = arith.addf %153, %152 : vector<2x384xf32>
      %155 = arith.divf %153, %154 : vector<2x384xf32>
      %156 = vector.extract_strided_slice %155 {offsets = [0, 0], sizes = [2, 128], strides = [1, 1]} : vector<2x384xf32> to vector<2x128xf32>
      %157 = vector.extract_strided_slice %155 {offsets = [0, 128], sizes = [2, 128], strides = [1, 1]} : vector<2x384xf32> to vector<2x128xf32>
      %158 = vector.extract_strided_slice %155 {offsets = [0, 256], sizes = [2, 128], strides = [1, 1]} : vector<2x384xf32> to vector<2x128xf32>
      %159 = vector.extract_strided_slice %149 {offsets = [0, 384], sizes = [2, 128], strides = [1, 1]} : vector<2x512xf32> to vector<2x128xf32>
      %160 = math.tanh %159 : vector<2x128xf32>
      %161 = arith.mulf %157, %137 : vector<2x128xf32>
      %162 = arith.mulf %156, %160 : vector<2x128xf32>
      %163 = arith.addf %161, %162 : vector<2x128xf32>
      %164 = math.tanh %163 : vector<2x128xf32>
      %165 = arith.mulf %158, %164 : vector<2x128xf32>
      %c5_i32 = arith.constant 5 : i32
      %166 = arith.addi %12, %c5_i32 : i32
      %167 = vector.broadcast %166 : i32 to vector<2x1xi32>
      %168 = arith.cmpi eq, %11, %167 : vector<2x1xi32>
      %169 = vector.shape_cast %168 : vector<2x1xi1> to vector<2x1xi1>
      %170 = vector.broadcast %169 : vector<2x1xi1> to vector<2x128xi1>
      %171 = arith.select %170, %165, %145 : vector<2x128xi1>, vector<2x128xf32>
      %c12 = arith.constant 12 : index
      %c0_33 = arith.constant 0 : index
      %172 = vector.load %arg3[%c12, %c0_33] : memref<16x512xf32, #tpu.memory_space<vmem>>, vector<2x512xf32>
      %173 = arith.truncf %165 : vector<2x128xf32> to vector<2x128xbf16>
      %cst_34 = arith.constant dense<0.000000e+00> : vector<2x512xf32>
      %174 = tpu.matmul %173, %10, %cst_34 {dimension_numbers = #tpu.dot_dimension_numbers<[1], [0], [0], [1], [0, 0, 1, 1], [], []>} : vector<2x128xbf16>, vector<128x512xbf16>, vector<2x512xf32> -> vector<2x512xf32>
      %175 = arith.addf %172, %174 : vector<2x512xf32>
      %176 = vector.extract_strided_slice %175 {offsets = [0, 0], sizes = [2, 384], strides = [1, 1]} : vector<2x512xf32> to vector<2x384xf32>
      %177 = arith.negf %176 : vector<2x384xf32>
      %178 = math.exp %177 : vector<2x384xf32>
      %cst_35 = arith.constant 1.000000e+00 : f32
      %179 = vector.broadcast %cst_35 : f32 to vector<2x384xf32>
      %180 = arith.addf %179, %178 : vector<2x384xf32>
      %181 = arith.divf %179, %180 : vector<2x384xf32>
      %182 = vector.extract_strided_slice %181 {offsets = [0, 0], sizes = [2, 128], strides = [1, 1]} : vector<2x384xf32> to vector<2x128xf32>
      %183 = vector.extract_strided_slice %181 {offsets = [0, 128], sizes = [2, 128], strides = [1, 1]} : vector<2x384xf32> to vector<2x128xf32>
      %184 = vector.extract_strided_slice %181 {offsets = [0, 256], sizes = [2, 128], strides = [1, 1]} : vector<2x384xf32> to vector<2x128xf32>
      %185 = vector.extract_strided_slice %175 {offsets = [0, 384], sizes = [2, 128], strides = [1, 1]} : vector<2x512xf32> to vector<2x128xf32>
      %186 = math.tanh %185 : vector<2x128xf32>
      %187 = arith.mulf %183, %163 : vector<2x128xf32>
      %188 = arith.mulf %182, %186 : vector<2x128xf32>
      %189 = arith.addf %187, %188 : vector<2x128xf32>
      %190 = math.tanh %189 : vector<2x128xf32>
      %191 = arith.mulf %184, %190 : vector<2x128xf32>
      %c6_i32 = arith.constant 6 : i32
      %192 = arith.addi %12, %c6_i32 : i32
      %193 = vector.broadcast %192 : i32 to vector<2x1xi32>
      %194 = arith.cmpi eq, %11, %193 : vector<2x1xi32>
      %195 = vector.shape_cast %194 : vector<2x1xi1> to vector<2x1xi1>
      %196 = vector.broadcast %195 : vector<2x1xi1> to vector<2x128xi1>
      %197 = arith.select %196, %191, %171 : vector<2x128xi1>, vector<2x128xf32>
      %c14 = arith.constant 14 : index
      %c0_36 = arith.constant 0 : index
      %198 = vector.load %arg3[%c14, %c0_36] : memref<16x512xf32, #tpu.memory_space<vmem>>, vector<2x512xf32>
      %199 = arith.truncf %191 : vector<2x128xf32> to vector<2x128xbf16>
      %cst_37 = arith.constant dense<0.000000e+00> : vector<2x512xf32>
      %200 = tpu.matmul %199, %10, %cst_37 {dimension_numbers = #tpu.dot_dimension_numbers<[1], [0], [0], [1], [0, 0, 1, 1], [], []>} : vector<2x128xbf16>, vector<128x512xbf16>, vector<2x512xf32> -> vector<2x512xf32>
      %201 = arith.addf %198, %200 : vector<2x512xf32>
      %202 = vector.extract_strided_slice %201 {offsets = [0, 0], sizes = [2, 384], strides = [1, 1]} : vector<2x512xf32> to vector<2x384xf32>
      %203 = arith.negf %202 : vector<2x384xf32>
      %204 = math.exp %203 : vector<2x384xf32>
      %cst_38 = arith.constant 1.000000e+00 : f32
      %205 = vector.broadcast %cst_38 : f32 to vector<2x384xf32>
      %206 = arith.addf %205, %204 : vector<2x384xf32>
      %207 = arith.divf %205, %206 : vector<2x384xf32>
      %208 = vector.extract_strided_slice %207 {offsets = [0, 0], sizes = [2, 128], strides = [1, 1]} : vector<2x384xf32> to vector<2x128xf32>
      %209 = vector.extract_strided_slice %207 {offsets = [0, 128], sizes = [2, 128], strides = [1, 1]} : vector<2x384xf32> to vector<2x128xf32>
      %210 = vector.extract_strided_slice %207 {offsets = [0, 256], sizes = [2, 128], strides = [1, 1]} : vector<2x384xf32> to vector<2x128xf32>
      %211 = vector.extract_strided_slice %201 {offsets = [0, 384], sizes = [2, 128], strides = [1, 1]} : vector<2x512xf32> to vector<2x128xf32>
      %212 = math.tanh %211 : vector<2x128xf32>
      %213 = arith.mulf %209, %189 : vector<2x128xf32>
      %214 = arith.mulf %208, %212 : vector<2x128xf32>
      %215 = arith.addf %213, %214 : vector<2x128xf32>
      %216 = math.tanh %215 : vector<2x128xf32>
      %217 = arith.mulf %210, %216 : vector<2x128xf32>
      %c7_i32 = arith.constant 7 : i32
      %218 = arith.addi %12, %c7_i32 : i32
      %219 = vector.broadcast %218 : i32 to vector<2x1xi32>
      %220 = arith.cmpi eq, %11, %219 : vector<2x1xi32>
      %221 = vector.shape_cast %220 : vector<2x1xi1> to vector<2x1xi1>
      %222 = vector.broadcast %221 : vector<2x1xi1> to vector<2x128xi1>
      %223 = arith.select %222, %217, %197 : vector<2x128xi1>, vector<2x128xf32>
      %c0_39 = arith.constant 0 : index
      %c0_40 = arith.constant 0 : index
      %224 = vector.load %arg8[%c0_39, %c0_40] : memref<2x128xf32, #tpu.memory_space<vmem>>, vector<2x128xf32>
      tpu.vector_store %arg8[%c0_39, %c0_40], %217 {strides = array<i32>} : memref<2x128xf32, #tpu.memory_space<vmem>>, vector<2x128xf32>,
      %c0_41 = arith.constant 0 : index
      %c0_42 = arith.constant 0 : index
      %225 = vector.load %arg9[%c0_41, %c0_42] : memref<2x128xf32, #tpu.memory_space<vmem>>, vector<2x128xf32>
      tpu.vector_store %arg9[%c0_41, %c0_42], %215 {strides = array<i32>} : memref<2x128xf32, #tpu.memory_space<vmem>>, vector<2x128xf32>,
      %c0_43 = arith.constant 0 : index
      %c0_44 = arith.constant 0 : index
      %226 = vector.load %arg10[%c0_43, %c0_44] : memref<2x128xf32, #tpu.memory_space<vmem>>, vector<2x128xf32>
      tpu.vector_store %arg10[%c0_43, %c0_44], %223 {strides = array<i32>} : memref<2x128xf32, #tpu.memory_space<vmem>>, vector<2x128xf32>,
    } else {
    }
    %c0_i32_2 = arith.constant 0 : i32
    %7 = arith.cmpi eq, %arg0, %c0_i32_2 : i32
    %8 = arith.extui %7 : i1 to i32
    %c0_i32_3 = arith.constant 0 : i32
    %9 = arith.cmpi ne, %8, %c0_i32_3 : i32
    scf.if %9 {
      %c0_4 = arith.constant 0 : index
      %c0_5 = arith.constant 0 : index
      %10 = vector.load %arg10[%c0_4, %c0_5] : memref<2x128xf32, #tpu.memory_space<vmem>>, vector<2x128xf32>
      %c0_6 = arith.constant 0 : index
      %c0_7 = arith.constant 0 : index
      %11 = vector.load %arg5[%c0_6, %c0_7] : memref<128x128xf32, #tpu.memory_space<vmem>>, vector<128x128xf32>
      %cst = arith.constant dense<0.000000e+00> : vector<2x128xf32>
      %12 = tpu.matmul %10, %11, %cst {dimension_numbers = #tpu.dot_dimension_numbers<[1], [0], [0], [1], [0, 0, 1, 1], [], []>} : vector<2x128xf32>, vector<128x128xf32>, vector<2x128xf32> -> vector<2x128xf32>
      %c0_8 = arith.constant 0 : index
      %c0_9 = arith.constant 0 : index
      %13 = vector.load %arg6[%c0_8, %c0_9] : memref<1x128xf32, #tpu.memory_space<vmem>>, vector<1x128xf32>
      %14 = vector.broadcast %13 : vector<1x128xf32> to vector<2x128xf32>
      %15 = arith.addf %12, %14 : vector<2x128xf32>
      %c0_10 = arith.constant 0 : index
      %c0_11 = arith.constant 0 : index
      %16 = vector.load %arg7[%c0_10, %c0_11] : memref<2x128xf32, #tpu.memory_space<vmem>>, vector<2x128xf32>
      tpu.vector_store %arg7[%c0_10, %c0_11], %15 {strides = array<i32>} : memref<2x128xf32, #tpu.memory_space<vmem>>, vector<2x128xf32>,
    } else {
    }
    return
  }
  func.func @transform_0(%arg0: i32, %arg1: memref<1xi32, #tpu.memory_space<smem>>) -> (i32, i32) {
    %c0_i32 = arith.constant 0 : i32
    %c0_i32_0 = arith.constant 0 : i32
    %c0_i32_1 = arith.constant 0 : i32
    return %c0_i32, %c0_i32_0 : i32, i32
  }
  func.func @transform_1(%arg0: i32, %arg1: memref<1xi32, #tpu.memory_space<smem>>) -> (i32, i32) {
    %c0 = arith.constant 0 : index
    %0 = memref.load %arg1[%c0] : memref<1xi32, #tpu.memory_space<smem>>
    %1 = arith.minsi %arg0, %0 : i32
    %c0_i32 = arith.constant 0 : i32
    %c0_i32_0 = arith.constant 0 : i32
    return %1, %c0_i32 : i32, i32
  }
  func.func @transform_2(%arg0: i32, %arg1: memref<1xi32, #tpu.memory_space<smem>>) -> (i32, i32) {
    %c0_i32 = arith.constant 0 : i32
    %c0_i32_0 = arith.constant 0 : i32
    %c0_i32_1 = arith.constant 0 : i32
    return %c0_i32, %c0_i32_0 : i32, i32
  }
  func.func @transform_3(%arg0: i32, %arg1: memref<1xi32, #tpu.memory_space<smem>>) -> (i32, i32) {
    %c0_i32 = arith.constant 0 : i32
    %c0_i32_0 = arith.constant 0 : i32
    %c0_i32_1 = arith.constant 0 : i32
    return %c0_i32, %c0_i32_0 : i32, i32
  }
  func.func @transform_4(%arg0: i32, %arg1: memref<1xi32, #tpu.memory_space<smem>>) -> (i32, i32) {
    %c0_i32 = arith.constant 0 : i32
    %c0_i32_0 = arith.constant 0 : i32
    %c0_i32_1 = arith.constant 0 : i32
    return %c0_i32, %c0_i32_0 : i32, i32
  }
  func.func @transform_5(%arg0: i32, %arg1: memref<1xi32, #tpu.memory_space<smem>>) -> (i32, i32) {
    %c0_i32 = arith.constant 0 : i32
    %c0_i32_0 = arith.constant 0 : i32
    %c0_i32_1 = arith.constant 0 : i32
    return %c0_i32, %c0_i32_0 : i32, i32
  }
}

</mosaic_0001>

<llo_original>
// kernel: predictor_forward.1
$region0: #{predictor_forward.1}
  #allocation0 [shape = 'u32[]', space=smem, size = 0x4, offset = 0x4, fixed_abs, tag = 'smem constant byte address 0x4 - core index']
  #allocation1 [shape = 'u32[144,128]{1,0:T(1,128)}', space=vmem, size = 0x12000, scoped, tag = 'internal scratch']
  #allocation2 [shape = 'f32[2,128]{1,0:T(2,128)}', space=vmem, size = 0x400, scoped, tag = 'scratch operand']
  #allocation3 [shape = 'f32[2,128]{1,0:T(2,128)}', space=vmem, size = 0x400, scoped, tag = 'scratch operand']
  #allocation4 [shape = 'f32[2,128]{1,0:T(2,128)}', space=vmem, size = 0x400, scoped, tag = 'scratch operand']
  #allocation5 [shape = 's32[1]{0}', space=sflag, size = 0x4, scoped, tag = 'scoped memory for predictor_forward.1']
  #allocation6 [shape = 's32[1]{0:T(128)S(6)}', space=smem, size = 0x200, scoped, tag = 'prefetched SMEM operand 0']
  %s0 = inlined_call_operand.<no memory space> [shape: s32[1], index: 0, kind: input, shape index: {}]
  %s1 = inlined_call_operand.vmem [shape: s32[2,1], index: 1, kind: input, shape index: {}]
  %s2 = inlined_call_operand.vmem [shape: f32[16,512], index: 2, kind: input, shape index: {}]
  %s3 = inlined_call_operand.vmem [shape: bf16[128,512], index: 3, kind: input, shape index: {}]
  %s4 = inlined_call_operand.vmem [shape: f32[128,128], index: 4, kind: input, shape index: {}]
  %s5 = inlined_call_operand.vmem [shape: f32[1,128], index: 5, kind: input, shape index: {}]
  %s6 = inlined_call_operand.hbm [shape: f32[2,128], index: 6, kind: output, shape index: {}]
  %s7 = sld [smem:[#allocation0]]
  $region42: #{predictor_forward.1} parent=0
    _
  %s9 = ssub.s32 1, %s7
  %s10 = scalar_select 0, %s9, %s7
  %11 = sst [smem:[#allocation6]] %s0
  $region1: #{predictor_forward.1} parent=0
    #allocation7 [shape = 'u8[1024]{0}', space=vmem, size = 0x400, scoped, tag = 'output window, operand 0, single buffered']
    #allocation8 [shape = 's32[1]{0}', space=sflag, size = 0x4, scoped, tag = 'scoped memory for predictor_forward.1']
    %12 = vsyncpa [#allocation8], 0
    // Predicated region
    $region2: #{predictor_forward.1} parent=1 // pred_check
      _
    $region3: #{predictor_forward.1} parent=1 // pred_check_branch
      %14 = sbr.rel (0) target = $region5
    $region4: #{predictor_forward.1} parent=1 // pred_region
      _
    $region5: #{predictor_forward.1} parent=1 // pred_fallthru
      _
    // Predicated region
    $region6: #{predictor_forward.1} parent=1 // pred_check
      _
    $region7: #{predictor_forward.1} parent=1 // pred_check_branch
      %16 = sbr.rel (0) target = $region9
    $region8: #{predictor_forward.1} parent=1 // pred_region
      %s17 = sld [smem:[#allocation6]]
      %p18 = scmp.lt.s32.totalorder 0, %s17
      %s19 = scalar_select %p18, 0, %s17
      %s20 = smul.u32 2, %s19
      %p21 = scmp.lt.s32.totalorder %s20, 1
      %s22 = scalar_select %p21, %s20, 1
      %s23 = smul.addr %s22, 4
      %s24 = smul.addr %s23, 8
      %s25 = scalar_lea.vmem %s2, %s24
      %s26 = sld [smem:[#allocation6]]
      %p27 = scmp.lt.s32.totalorder 0, %s26
      %s28 = scalar_select %p27, 0, %s26
      %s29 = smul.u32 2, %s28
    $region9: #{predictor_forward.1} parent=1 // pred_fallthru
      _
    // Predicated region
    $region10: #{predictor_forward.1} parent=1 // pred_check
      _
    $region11: #{predictor_forward.1} parent=1 // pred_check_branch
      %31 = sbr.rel (0) target = $region13
    $region12: #{predictor_forward.1} parent=1 // pred_region
      _
    $region13: #{predictor_forward.1} parent=1 // pred_fallthru
      _
    // Predicated region
    $region14: #{predictor_forward.1} parent=1 // pred_check
      _
    $region15: #{predictor_forward.1} parent=1 // pred_check_branch
      %33 = sbr.rel (0) target = $region17
    $region16: #{predictor_forward.1} parent=1 // pred_region
      _
    $region17: #{predictor_forward.1} parent=1 // pred_fallthru
      _
    // Predicated region
    $region18: #{predictor_forward.1} parent=1 // pred_check
      _
    $region19: #{predictor_forward.1} parent=1 // pred_check_branch
      %35 = sbr.rel (0) target = $region21
    $region20: #{predictor_forward.1} parent=1 // pred_region
      _
    $region21: #{predictor_forward.1} parent=1 // pred_fallthru
      _
    %s36 = sld [smem:[#allocation6]]
    %p37 = scmp.lt.s32.totalorder 0, %s36
    %s38 = scalar_select %p37, 0, %s36
    %s39 = smul.u32 2, %s38
    %p40 = scmp.lt.s32.totalorder %s39, 1
    %s41 = scalar_select %p40, %s39, 1
    %s42 = smul.addr %s41, 4
    %s43 = smul.addr %s42, 8
    %s44 = scalar_lea.vmem %s2, %s43
    %s45 = sld [smem:[#allocation6]]
    %p46 = scmp.lt.s32.totalorder 0, %s45
    %s47 = scalar_select %p46, 0, %s45
    %s48 = smul.u32 2, %s47
    %p49 = scmp.lt.s32.totalorder %s48, 1
    %s50 = scalar_select %p49, %s48, 1
    %s51 = smul.addr %s50, 4
    %s52 = smul.addr %s51, 8
    %s53 = scalar_lea.vmem %s2, %s52
    %s54 = sld [smem:[#allocation6]]
    %p55 = scmp.lt.s32.totalorder 0, %s54
    %s56 = scalar_select %p55, 0, %s54
    %s57 = smul.u32 2, %s56
    %p59 = scmp.eq.s32.totalorder 0, 0
    // Predicated region
    $region22: #{predictor_forward.1} parent=1 // pred_check
      %p60 = pneg %p59
    $region23: #{predictor_forward.1} parent=1 // pred_check_branch
      %62 = sbr.rel (%p60) target = $region25
    $region24: #{predictor_forward.1} parent=1 // pred_region
      %63 = vst [vmem:[#allocation2] sm:$0x3] 0.0
      %64 = vst [vmem:[#allocation3] sm:$0x3] 0.0
      %65 = vst [vmem:[#allocation4] sm:$0x3] 0.0
    $region25: #{predictor_forward.1} parent=1 // pred_fallthru
      _
    %s66 = sld [smem:[#allocation6]]
    %p67 = scmp.le.s32.totalorder 0, %s66
    // Predicated region
    $region26: #{predictor_forward.1} parent=1 // pred_check
      %p68 = pneg %p67
    $region27: #{predictor_forward.1} parent=1 // pred_check_branch
      %70 = sbr.rel (%p68) target = $region29
    $region28: #{predictor_forward.1} parent=1 // pred_region
      %v71 = vld [vmem:[%s3] sm:$0xff]
      %v72 = vld [vmem:[%s3 + $0x8] sm:$0xff]
      %v73 = vld [vmem:[%s3 + $0x10] sm:$0xff]
      %v74 = vld [vmem:[%s3 + $0x18] sm:$0xff]
      %v75 = vld [vmem:[%s3 + $0x20] sm:$0xff]
      %v76 = vld [vmem:[%s3 + $0x28] sm:$0xff]
      %v77 = vld [vmem:[%s3 + $0x30] sm:$0xff]
      %v78 = vld [vmem:[%s3 + $0x38] sm:$0xff]
      %v79 = vld [vmem:[%s3 + $0x40] sm:$0xff]
      %v80 = vld [vmem:[%s3 + $0x48] sm:$0xff]
      %v81 = vld [vmem:[%s3 + $0x50] sm:$0xff]
      %v82 = vld [vmem:[%s3 + $0x58] sm:$0xff]
      %v83 = vld [vmem:[%s3 + $0x60] sm:$0xff]
      %v84 = vld [vmem:[%s3 + $0x68] sm:$0xff]
      %v85 = vld [vmem:[%s3 + $0x70] sm:$0xff]
      %v86 = vld [vmem:[%s3 + $0x78] sm:$0xff]
      %v87 = vld [vmem:[%s3 + $0x80] sm:$0xff]
      %v88 = vld [vmem:[%s3 + $0x88] sm:$0xff]
      %v89 = vld [vmem:[%s3 + $0x90] sm:$0xff]
      %v90 = vld [vmem:[%s3 + $0x98] sm:$0xff]
      %v91 = vld [vmem:[%s3 + $0xa0] sm:$0xff]
      %v92 = vld [vmem:[%s3 + $0xa8] sm:$0xff]
      %v93 = vld [vmem:[%s3 + $0xb0] sm:$0xff]
      %v94 = vld [vmem:[%s3 + $0xb8] sm:$0xff]
      %v95 = vld [vmem:[%s3 + $0xc0] sm:$0xff]
      %v96 = vld [vmem:[%s3 + $0xc8] sm:$0xff]
      %v97 = vld [vmem:[%s3 + $0xd0] sm:$0xff]
      %v98 = vld [vmem:[%s3 + $0xd8] sm:$0xff]
      %v99 = vld [vmem:[%s3 + $0xe0] sm:$0xff]
      %v100 = vld [vmem:[%s3 + $0xe8] sm:$0xff]
      %v101 = vld [vmem:[%s3 + $0xf0] sm:$0xff]
      %v102 = vld [vmem:[%s3 + $0xf8] sm:$0xff]
      %v103 = vld [vmem:[%s1] sm:$0x3]
      %s104 = smul.u32 0, 8
      %v105 = vld [vmem:[#allocation2] sm:$0x3]
      %v106 = vld [vmem:[#allocation3] sm:$0x3]
      %v107 = vld [vmem:[#allocation4] sm:$0x3]
      %v108 = vld [vmem:[%s53] sm:$0x3]
      %v109 = vld [vmem:[%s53 + $0x8] sm:$0x3]
      %v110 = vld [vmem:[%s53 + $0x10] sm:$0x3]
      %v111 = vld [vmem:[%s53 + $0x18] sm:$0x3]
      %v112 = vpack.c.bf16 %v105, %v105
      %v145 = vunpack.c.l.b16 %v71
      %v146 = vunpack.c.h.b16 %v71
      %v147 = vunpack.c.l.b16 %v72
      %v148 = vunpack.c.h.b16 %v72
      %v149 = vunpack.c.l.b16 %v73
      %v150 = vunpack.c.h.b16 %v73
      %v151 = vunpack.c.l.b16 %v74
      %v152 = vunpack.c.h.b16 %v74
      %v153 = vunpack.c.l.b16 %v75
      %v154 = vunpack.c.h.b16 %v75
      %v155 = vunpack.c.l.b16 %v76
      %v156 = vunpack.c.h.b16 %v76
      %v157 = vunpack.c.l.b16 %v77
      %v158 = vunpack.c.h.b16 %v77
      %v159 = vunpack.c.l.b16 %v78
      %v160 = vunpack.c.h.b16 %v78
      %v161 = vunpack.c.l.b16 %v79
      %v162 = vunpack.c.h.b16 %v79
      %v163 = vunpack.c.l.b16 %v80
      %v164 = vunpack.c.h.b16 %v80
      %v165 = vunpack.c.l.b16 %v81
      %v166 = vunpack.c.h.b16 %v81
      %v167 = vunpack.c.l.b16 %v82
      %v168 = vunpack.c.h.b16 %v82
      %v169 = vunpack.c.l.b16 %v83
      %v170 = vunpack.c.h.b16 %v83
      %v171 = vunpack.c.l.b16 %v84
      %v172 = vunpack.c.h.b16 %v84
      %v173 = vunpack.c.l.b16 %v85
      %v174 = vunpack.c.h.b16 %v85
      %v175 = vunpack.c.l.b16 %v86
      %v176 = vunpack.c.h.b16 %v86
      %v177 = vunpack.c.l.b16 %v87
      %v178 = vunpack.c.h.b16 %v87
      %v179 = vunpack.c.l.b16 %v88
      %v180 = vunpack.c.h.b16 %v88
      %v181 = vunpack.c.l.b16 %v89
      %v182 = vunpack.c.h.b16 %v89
      %v183 = vunpack.c.l.b16 %v90
      %v184 = vunpack.c.h.b16 %v90
      %v185 = vunpack.c.l.b16 %v91
      %v186 = vunpack.c.h.b16 %v91
      %v187 = vunpack.c.l.b16 %v92
      %v188 = vunpack.c.h.b16 %v92
      %v189 = vunpack.c.l.b16 %v93
      %v190 = vunpack.c.h.b16 %v93
      %v191 = vunpack.c.l.b16 %v94
      %v192 = vunpack.c.h.b16 %v94
      %v193 = vunpack.c.l.b16 %v95
      %v194 = vunpack.c.h.b16 %v95
      %v195 = vunpack.c.l.b16 %v96
      %v196 = vunpack.c.h.b16 %v96
      %v197 = vunpack.c.l.b16 %v97
      %v198 = vunpack.c.h.b16 %v97
      %v199 = vunpack.c.l.b16 %v98
      %v200 = vunpack.c.h.b16 %v98
      %v201 = vunpack.c.l.b16 %v99
      %v202 = vunpack.c.h.b16 %v99
      %v203 = vunpack.c.l.b16 %v100
      %v204 = vunpack.c.h.b16 %v100
      %v205 = vunpack.c.l.b16 %v101
      %v206 = vunpack.c.h.b16 %v101
      %v207 = vunpack.c.l.b16 %v102
      %v208 = vunpack.c.h.b16 %v102
      %v209 = vpack.c.b16 %v149, %v145
      %v210 = vpack.c.b16 %v150, %v146
      %v211 = vpack.c.b16 %v151, %v147
      %v212 = vpack.c.b16 %v152, %v148
      %v213 = vpack.c.b16 %v157, %v153
      %v214 = vpack.c.b16 %v158, %v154
      %v215 = vpack.c.b16 %v159, %v155
      %v216 = vpack.c.b16 %v160, %v156
      %v217 = vpack.c.b16 %v165, %v161
      %v218 = vpack.c.b16 %v166, %v162
      %v219 = vpack.c.b16 %v167, %v163
      %v220 = vpack.c.b16 %v168, %v164
      %v221 = vpack.c.b16 %v173, %v169
      %v222 = vpack.c.b16 %v174, %v170
      %v223 = vpack.c.b16 %v175, %v171
      %v224 = vpack.c.b16 %v176, %v172
      %v225 = vpack.c.b16 %v181, %v177
      %v226 = vpack.c.b16 %v182, %v178
      %v227 = vpack.c.b16 %v183, %v179
      %v228 = vpack.c.b16 %v184, %v180
      %v229 = vpack.c.b16 %v189, %v185
      %v230 = vpack.c.b16 %v190, %v186
      %v231 = vpack.c.b16 %v191, %v187
      %v232 = vpack.c.b16 %v192, %v188
      %v233 = vpack.c.b16 %v197, %v193
      %v234 = vpack.c.b16 %v198, %v194
      %v235 = vpack.c.b16 %v199, %v195
      %v236 = vpack.c.b16 %v200, %v196
      %v237 = vpack.c.b16 %v205, %v201
      %v238 = vpack.c.b16 %v206, %v202
      %v239 = vpack.c.b16 %v207, %v203
      %v240 = vpack.c.b16 %v208, %v204
      %273 = vmatprep.subr.bf16.mxu0 %v210
      %274 = vmatpush1.bf16.msra.mxu0 %v209
      %275 = vmatprep.subr.bf16.mxu0 %v214
      %276 = vmatpush1.bf16.msra.mxu0 %v213
      %277 = vmatprep.subr.bf16.mxu0 %v218
      %278 = vmatpush1.bf16.msra.mxu0 %v217
      %279 = vmatprep.subr.bf16.mxu0 %v222
      %280 = vmatpush1.bf16.msra.mxu0 %v221
      %281 = vmatprep.subr.bf16.mxu0 %v226
      %282 = vmatpush1.bf16.msra.mxu0 %v225
      %283 = vmatprep.subr.bf16.mxu0 %v230
      %284 = vmatpush1.bf16.msra.mxu0 %v229
      %285 = vmatprep.subr.bf16.mxu0 %v234
      %286 = vmatpush1.bf16.msra.mxu0 %v233
      %287 = vmatprep.subr.bf16.mxu0 %v238
      %288 = vmatpush1.bf16.msra.mxu0 %v237
      %289 = vmatprep.subr.bf16.mxu0 0
      %290 = vmatpush1.bf16.msra.mxu0 0
      %291 = vmatprep.subr.bf16.mxu0 0
      %292 = vmatpush1.bf16.msra.mxu0 0
      %293 = vmatprep.subr.bf16.mxu0 0
      %294 = vmatpush1.bf16.msra.mxu0 0
      %295 = vmatprep.subr.bf16.mxu0 0
      %296 = vmatpush1.bf16.msra.mxu0 0
      %297 = vmatprep.subr.bf16.mxu0 0
      %298 = vmatpush1.bf16.msra.mxu0 0
      %299 = vmatprep.subr.bf16.mxu0 0
      %300 = vmatpush1.bf16.msra.mxu0 0
      %301 = vmatprep.subr.bf16.mxu0 0
      %302 = vmatpush1.bf16.msra.mxu0 0
      %303 = vmatprep.subr.bf16.mxu0 0
      %304 = vmatpush1.bf16.msra.mxu0 0
      %305 = vmatprep.mubr.bf16.mxu0 0
      %306 = vmatmul.mubr.bf16.gmra.mrb[0].mxu0 %v112
      %v307 = vpop.f32.mrb[0].mxu0
      %v308 = vadd.f32 0.0, %v307
      %v309 = vpop.f32.mrb[0].mxu0
      %v310 = vadd.f32 0.0, %v309
      %v311 = vpop.f32.mrb[0].mxu0
      %v312 = vpop.f32.mrb[0].mxu0
      %313 = vdwg.mxu0
      %314 = vmatprep.subr.bf16.mxu0 %v212
      %315 = vmatpush1.bf16.msra.mxu0 %v211
      %316 = vmatprep.subr.bf16.mxu0 %v216
      %317 = vmatpush1.bf16.msra.mxu0 %v215
      %318 = vmatprep.subr.bf16.mxu0 %v220
      %319 = vmatpush1.bf16.msra.mxu0 %v219
      %320 = vmatprep.subr.bf16.mxu0 %v224
      %321 = vmatpush1.bf16.msra.mxu0 %v223
      %322 = vmatprep.subr.bf16.mxu0 %v228
      %323 = vmatpush1.bf16.msra.mxu0 %v227
      %324 = vmatprep.subr.bf16.mxu0 %v232
      %325 = vmatpush1.bf16.msra.mxu0 %v231
      %326 = vmatprep.subr.bf16.mxu0 %v236
      %327 = vmatpush1.bf16.msra.mxu0 %v235
      %328 = vmatprep.subr.bf16.mxu0 %v240
      %329 = vmatpush1.bf16.msra.mxu0 %v239
      %330 = vmatprep.subr.bf16.mxu0 0
      %331 = vmatpush1.bf16.msra.mxu0 0
      %332 = vmatprep.subr.bf16.mxu0 0
      %333 = vmatpush1.bf16.msra.mxu0 0
      %334 = vmatprep.subr.bf16.mxu0 0
      %335 = vmatpush1.bf16.msra.mxu0 0
      %336 = vmatprep.subr.bf16.mxu0 0
      %337 = vmatpush1.bf16.msra.mxu0 0
      %338 = vmatprep.subr.bf16.mxu0 0
      %339 = vmatpush1.bf16.msra.mxu0 0
      %340 = vmatprep.subr.bf16.mxu0 0
      %341 = vmatpush1.bf16.msra.mxu0 0
      %342 = vmatprep.subr.bf16.mxu0 0
      %343 = vmatpush1.bf16.msra.mxu0 0
      %344 = vmatprep.subr.bf16.mxu0 0
      %345 = vmatpush1.bf16.msra.mxu0 0
      %346 = vmatprep.mubr.bf16.mxu0 0
      %347 = vmatmul.mubr.bf16.gmra.mrb[0].mxu0 %v112
      %v348 = vpop.f32.mrb[0].mxu0
      %v349 = vadd.f32 0.0, %v348
      %v350 = vpop.f32.mrb[0].mxu0
      %v351 = vadd.f32 0.0, %v350
      %v352 = vpop.f32.mrb[0].mxu0
      %v353 = vpop.f32.mrb[0].mxu0
      %354 = vdwg.mxu0
      %v355 = vadd.f32 %v108, %v308
      %v356 = vadd.f32 %v109, %v310
      %v357 = vadd.f32 %v110, %v349
      %v358 = vadd.f32 %v111, %v351
      %v359 = vxor.u32 %v355, 2147483648
      %v360 = vxor.u32 %v356, 2147483648
      %v361 = vxor.u32 %v357, 2147483648
      %v362 = vmul.f32 %v359, 1.442695
      %v363 = vpow.pop %v362
      %v364 = vmul.f32 %v360, 1.442695
      %v365 = vpow.pop %v364
      %v366 = vmul.f32 %v361, 1.442695
      %v367 = vpow.pop %v366
      %v368 = vadd.f32 %v363, 1.0
      %v369 = vadd.f32 %v365, 1.0
      %v370 = vadd.f32 %v367, 1.0
      %v371 = vrcp.pop %v368
      %v372 = vmul.f32 1.0, %v371
      %v373 = vrcp.pop %v369
      %v374 = vmul.f32 1.0, %v373
      %v375 = vrcp.pop %v370
      %v376 = vmul.f32 1.0, %v375
      %v377 = vtanh.pop %v358
      %v378 = vmul.f32 %v374, %v106
      %v379 = vmul.f32 %v372, %v377
      %v380 = vadd.f32 %v378, %v379
      %v381 = vtanh.pop %v380
      %v382 = vmul.f32 %v376, %v381
      %v383 = vstv %s104
      %vm384 = vcmp.eq.s32.totalorder %v103, %v383
      %v385 = vsel %vm384, 1, 0
      %386 = vset.pattern.permute.xlu0 0
      %387 = vperm.xlu0 %386, %v385
      %v388 = vpop.permute.xlu0 %387
      %vm389 = vcmp.eq.s32.totalorder %v388, 1
      %v390 = vsel %vm389, %v382, %v107
      %v391 = vld [vmem:[%s53] sm:$0xc]
      %v392 = vld [vmem:[%s53 + $0x8] sm:$0xc]
      %v393 = vld [vmem:[%s53 + $0x10] sm:$0xc]
      %v394 = vld [vmem:[%s53 + $0x18] sm:$0xc]
      %v395 = vpack.c.bf16 %v382, %v382
      %396 = vmatprep.subr.bf16.mxu0 %v210
      %397 = vmatpush1.bf16.msra.mxu0 %v209
      %398 = vmatprep.subr.bf16.mxu0 %v214
      %399 = vmatpush1.bf16.msra.mxu0 %v213
      %400 = vmatprep.subr.bf16.mxu0 %v218
      %401 = vmatpush1.bf16.msra.mxu0 %v217
      %402 = vmatprep.subr.bf16.mxu0 %v222
      %403 = vmatpush1.bf16.msra.mxu0 %v221
      %404 = vmatprep.subr.bf16.mxu0 %v226
      %405 = vmatpush1.bf16.msra.mxu0 %v225
      %406 = vmatprep.subr.bf16.mxu0 %v230
      %407 = vmatpush1.bf16.msra.mxu0 %v229
      %408 = vmatprep.subr.bf16.mxu0 %v234
      %409 = vmatpush1.bf16.msra.mxu0 %v233
      %410 = vmatprep.subr.bf16.mxu0 %v238
      %411 = vmatpush1.bf16.msra.mxu0 %v237
      %412 = vmatprep.subr.bf16.mxu0 0
      %413 = vmatpush1.bf16.msra.mxu0 0
      %414 = vmatprep.subr.bf16.mxu0 0
      %415 = vmatpush1.bf16.msra.mxu0 0
      %416 = vmatprep.subr.bf16.mxu0 0
      %417 = vmatpush1.bf16.msra.mxu0 0
      %418 = vmatprep.subr.bf16.mxu0 0
      %419 = vmatpush1.bf16.msra.mxu0 0
      %420 = vmatprep.subr.bf16.mxu0 0
      %421 = vmatpush1.bf16.msra.mxu0 0
      %422 = vmatprep.subr.bf16.mxu0 0
      %423 = vmatpush1.bf16.msra.mxu0 0
      %424 = vmatprep.subr.bf16.mxu0 0
      %425 = vmatpush1.bf16.msra.mxu0 0
      %426 = vmatprep.subr.bf16.mxu0 0
      %427 = vmatpush1.bf16.msra.mxu0 0
      %428 = vmatprep.mubr.bf16.mxu0 0
      %429 = vmatmul.mubr.bf16.gmra.mrb[0].mxu0 %v395
      %v430 = vpop.f32.mrb[0].mxu0
      %v431 = vadd.f32 0.0, %v430
      %v432 = vpop.f32.mrb[0].mxu0
      %v433 = vadd.f32 0.0, %v432
      %v434 = vpop.f32.mrb[0].mxu0
      %v435 = vpop.f32.mrb[0].mxu0
      %436 = vdwg.mxu0
      %437 = vmatprep.subr.bf16.mxu0 %v212
      %438 = vmatpush1.bf16.msra.mxu0 %v211
      %439 = vmatprep.subr.bf16.mxu0 %v216
      %440 = vmatpush1.bf16.msra.mxu0 %v215
      %441 = vmatprep.subr.bf16.mxu0 %v220
      %442 = vmatpush1.bf16.msra.mxu0 %v219
      %443 = vmatprep.subr.bf16.mxu0 %v224
      %444 = vmatpush1.bf16.msra.mxu0 %v223
      %445 = vmatprep.subr.bf16.mxu0 %v228
      %446 = vmatpush1.bf16.msra.mxu0 %v227
      %447 = vmatprep.subr.bf16.mxu0 %v232
      %448 = vmatpush1.bf16.msra.mxu0 %v231
      %449 = vmatprep.subr.bf16.mxu0 %v236
      %450 = vmatpush1.bf16.msra.mxu0 %v235
      %451 = vmatprep.subr.bf16.mxu0 %v240
      %452 = vmatpush1.bf16.msra.mxu0 %v239
      %453 = vmatprep.subr.bf16.mxu0 0
      %454 = vmatpush1.bf16.msra.mxu0 0
      %455 = vmatprep.subr.bf16.mxu0 0
      %456 = vmatpush1.bf16.msra.mxu0 0
      %457 = vmatprep.subr.bf16.mxu0 0
      %458 = vmatpush1.bf16.msra.mxu0 0
      %459 = vmatprep.subr.bf16.mxu0 0
      %460 = vmatpush1.bf16.msra.mxu0 0
      %461 = vmatprep.subr.bf16.mxu0 0
      %462 = vmatpush1.bf16.msra.mxu0 0
      %463 = vmatprep.subr.bf16.mxu0 0
      %464 = vmatpush1.bf16.msra.mxu0 0
      %465 = vmatprep.subr.bf16.mxu0 0
      %466 = vmatpush1.bf16.msra.mxu0 0
      %467 = vmatprep.subr.bf16.mxu0 0
      %468 = vmatpush1.bf16.msra.mxu0 0
      %469 = vmatprep.mubr.bf16.mxu0 0
      %470 = vmatmul.mubr.bf16.gmra.mrb[0].mxu0 %v395
      %v471 = vpop.f32.mrb[0].mxu0
      %v472 = vadd.f32 0.0, %v471
      %v473 = vpop.f32.mrb[0].mxu0
      %v474 = vadd.f32 0.0, %v473
      %v475 = vpop.f32.mrb[0].mxu0
      %v476 = vpop.f32.mrb[0].mxu0
      %477 = vdwg.mxu0
      %v482 = vrot.slane %v431, 6
      %v483 = vrot.slane %v433, 6
      %v484 = vrot.slane %v472, 6
      %v485 = vrot.slane %v474, 6
      %v490 = vadd.f32 %v391, %v482
      %v491 = vadd.f32 %v392, %v483
      %v492 = vadd.f32 %v393, %v484
      %v493 = vadd.f32 %v394, %v485
      %v494 = vxor.u32 %v490, 2147483648
      %v495 = vxor.u32 %v491, 2147483648
      %v496 = vxor.u32 %v492, 2147483648
      %v497 = vmul.f32 %v494, 1.442695
      %v498 = vpow.pop %v497
      %v499 = vmul.f32 %v495, 1.442695
      %v500 = vpow.pop %v499
      %v501 = vmul.f32 %v496, 1.442695
      %v502 = vpow.pop %v501
      %v503 = vadd.f32 %v498, 1.0
      %v504 = vadd.f32 %v500, 1.0
      %v505 = vadd.f32 %v502, 1.0
      %v506 = vrcp.pop %v503
      %v507 = vmul.f32 1.0, %v506
      %v508 = vrcp.pop %v504
      %v509 = vmul.f32 1.0, %v508
      %v510 = vrcp.pop %v505
      %v511 = vmul.f32 1.0, %v510
      %v512 = vtanh.pop %v493
      %v514 = vrot.slane %v380, 6
      %v516 = vmul.f32 %v509, %v514
      %v517 = vmul.f32 %v507, %v512
      %v518 = vadd.f32 %v516, %v517
      %v519 = vtanh.pop %v518
      %v520 = vmul.f32 %v511, %v519
      %s521 = sadd.s32 %s104, 1
      %v522 = vstv %s521
      %vm523 = vcmp.eq.s32.totalorder %v103, %v522
      %v524 = vsel %vm523, 1, 0
      %525 = vset.pattern.permute.xlu0 0
      %526 = vperm.xlu0 %525, %v524
      %v527 = vpop.permute.xlu0 %526
      %vm528 = vcmp.eq.s32.totalorder %v527, 1
      %v530 = vrot.slane %v520, 2
      %v532 = vsel %vm528, %v530, %v390
      %v533 = vld [vmem:[%s53] sm:$0x30]
      %v534 = vld [vmem:[%s53 + $0x8] sm:$0x30]
      %v535 = vld [vmem:[%s53 + $0x10] sm:$0x30]
      %v536 = vld [vmem:[%s53 + $0x18] sm:$0x30]
      %v537 = vpack.c.bf16 %v520, %v520
      %v539 = vrot.slane %v537, 1
      %541 = vmatprep.subr.bf16.mxu0 %v210
      %542 = vmatpush1.bf16.msra.mxu0 %v209
      %543 = vmatprep.subr.bf16.mxu0 %v214
      %544 = vmatpush1.bf16.msra.mxu0 %v213
      %545 = vmatprep.subr.bf16.mxu0 %v218
      %546 = vmatpush1.bf16.msra.mxu0 %v217
      %547 = vmatprep.subr.bf16.mxu0 %v222
      %548 = vmatpush1.bf16.msra.mxu0 %v221
      %549 = vmatprep.subr.bf16.mxu0 %v226
      %550 = vmatpush1.bf16.msra.mxu0 %v225
      %551 = vmatprep.subr.bf16.mxu0 %v230
      %552 = vmatpush1.bf16.msra.mxu0 %v229
      %553 = vmatprep.subr.bf16.mxu0 %v234
      %554 = vmatpush1.bf16.msra.mxu0 %v233
      %555 = vmatprep.subr.bf16.mxu0 %v238
      %556 = vmatpush1.bf16.msra.mxu0 %v237
      %557 = vmatprep.subr.bf16.mxu0 0
      %558 = vmatpush1.bf16.msra.mxu0 0
      %559 = vmatprep.subr.bf16.mxu0 0
      %560 = vmatpush1.bf16.msra.mxu0 0
      %561 = vmatprep.subr.bf16.mxu0 0
      %562 = vmatpush1.bf16.msra.mxu0 0
      %563 = vmatprep.subr.bf16.mxu0 0
      %564 = vmatpush1.bf16.msra.mxu0 0
      %565 = vmatprep.subr.bf16.mxu0 0
      %566 = vmatpush1.bf16.msra.mxu0 0
      %567 = vmatprep.subr.bf16.mxu0 0
      %568 = vmatpush1.bf16.msra.mxu0 0
      %569 = vmatprep.subr.bf16.mxu0 0
      %570 = vmatpush1.bf16.msra.mxu0 0
      %571 = vmatprep.subr.bf16.mxu0 0
      %572 = vmatpush1.bf16.msra.mxu0 0
      %573 = vmatprep.mubr.bf16.mxu0 0
      %574 = vmatmul.mubr.bf16.gmra.mrb[0].mxu0 %v539
      %v575 = vpop.f32.mrb[0].mxu0
      %v576 = vadd.f32 0.0, %v575
      %v577 = vpop.f32.mrb[0].mxu0
      %v578 = vadd.f32 0.0, %v577
      %v579 = vpop.f32.mrb[0].mxu0
      %v580 = vpop.f32.mrb[0].mxu0
      %581 = vdwg.mxu0
      %582 = vmatprep.subr.bf16.mxu0 %v212
      %583 = vmatpush1.bf16.msra.mxu0 %v211
      %584 = vmatprep.subr.bf16.mxu0 %v216
      %585 = vmatpush1.bf16.msra.mxu0 %v215
      %586 = vmatprep.subr.bf16.mxu0 %v220
      %587 = vmatpush1.bf16.msra.mxu0 %v219
      %588 = vmatprep.subr.bf16.mxu0 %v224
      %589 = vmatpush1.bf16.msra.mxu0 %v223
      %590 = vmatprep.subr.bf16.mxu0 %v228
      %591 = vmatpush1.bf16.msra.mxu0 %v227
      %592 = vmatprep.subr.bf16.mxu0 %v232
      %593 = vmatpush1.bf16.msra.mxu0 %v231
      %594 = vmatprep.subr.bf16.mxu0 %v236
      %595 = vmatpush1.bf16.msra.mxu0 %v235
      %596 = vmatprep.subr.bf16.mxu0 %v240
      %597 = vmatpush1.bf16.msra.mxu0 %v239
      %598 = vmatprep.subr.bf16.mxu0 0
      %599 = vmatpush1.bf16.msra.mxu0 0
      %600 = vmatprep.subr.bf16.mxu0 0
      %601 = vmatpush1.bf16.msra.mxu0 0
      %602 = vmatprep.subr.bf16.mxu0 0
      %603 = vmatpush1.bf16.msra.mxu0 0
      %604 = vmatprep.subr.bf16.mxu0 0
      %605 = vmatpush1.bf16.msra.mxu0 0
      %606 = vmatprep.subr.bf16.mxu0 0
      %607 = vmatpush1.bf16.msra.mxu0 0
      %608 = vmatprep.subr.bf16.mxu0 0
      %609 = vmatpush1.bf16.msra.mxu0 0
      %610 = vmatprep.subr.bf16.mxu0 0
      %611 = vmatpush1.bf16.msra.mxu0 0
      %612 = vmatprep.subr.bf16.mxu0 0
      %613 = vmatpush1.bf16.msra.mxu0 0
      %614 = vmatprep.mubr.bf16.mxu0 0
      %615 = vmatmul.mubr.bf16.gmra.mrb[0].mxu0 %v539
      %v616 = vpop.f32.mrb[0].mxu0
      %v617 = vadd.f32 0.0, %v616
      %v618 = vpop.f32.mrb[0].mxu0
      %v619 = vadd.f32 0.0, %v618
      %v620 = vpop.f32.mrb[0].mxu0
      %v621 = vpop.f32.mrb[0].mxu0
      %622 = vdwg.mxu0
      %v627 = vrot.slane %v576, 4
      %v628 = vrot.slane %v578, 4
      %v629 = vrot.slane %v617, 4
      %v630 = vrot.slane %v619, 4
      %v635 = vadd.f32 %v533, %v627
      %v636 = vadd.f32 %v534, %v628
      %v637 = vadd.f32 %v535, %v629
      %v638 = vadd.f32 %v536, %v630
      %v639 = vxor.u32 %v635, 2147483648
      %v640 = vxor.u32 %v636, 2147483648
      %v641 = vxor.u32 %v637, 2147483648
      %v642 = vmul.f32 %v639, 1.442695
      %v643 = vpow.pop %v642
      %v644 = vmul.f32 %v640, 1.442695
      %v645 = vpow.pop %v644
      %v646 = vmul.f32 %v641, 1.442695
      %v647 = vpow.pop %v646
      %v648 = vadd.f32 %v643, 1.0
      %v649 = vadd.f32 %v645, 1.0
      %v650 = vadd.f32 %v647, 1.0
      %v651 = vrcp.pop %v648
      %v652 = vmul.f32 1.0, %v651
      %v653 = vrcp.pop %v649
      %v654 = vmul.f32 1.0, %v653
      %v655 = vrcp.pop %v650
      %v656 = vmul.f32 1.0, %v655
      %v657 = vtanh.pop %v638
      %v659 = vrot.slane %v518, 6
      %v661 = vmul.f32 %v654, %v659
      %v662 = vmul.f32 %v652, %v657
      %v663 = vadd.f32 %v661, %v662
      %v664 = vtanh.pop %v663
      %v665 = vmul.f32 %v656, %v664
      %s666 = sadd.s32 %s104, 2
      %v667 = vstv %s666
      %vm668 = vcmp.eq.s32.totalorder %v103, %v667
      %v669 = vsel %vm668, 1, 0
      %670 = vset.pattern.permute.xlu0 0
      %671 = vperm.xlu0 %670, %v669
      %v672 = vpop.permute.xlu0 %671
      %vm673 = vcmp.eq.s32.totalorder %v672, 1
      %v675 = vrot.slane %v665, 4
      %v677 = vsel %vm673, %v675, %v532
      %v678 = vld [vmem:[%s53] sm:$0xc0]
      %v679 = vld [vmem:[%s53 + $0x8] sm:$0xc0]
      %v680 = vld [vmem:[%s53 + $0x10] sm:$0xc0]
      %v681 = vld [vmem:[%s53 + $0x18] sm:$0xc0]
      %v682 = vpack.c.bf16 %v665, %v665
      %v684 = vrot.slane %v682, 2
      %686 = vmatprep.subr.bf16.mxu0 %v210
      %687 = vmatpush1.bf16.msra.mxu0 %v209
      %688 = vmatprep.subr.bf16.mxu0 %v214
      %689 = vmatpush1.bf16.msra.mxu0 %v213
      %690 = vmatprep.subr.bf16.mxu0 %v218
      %691 = vmatpush1.bf16.msra.mxu0 %v217
      %692 = vmatprep.subr.bf16.mxu0 %v222
      %693 = vmatpush1.bf16.msra.mxu0 %v221
      %694 = vmatprep.subr.bf16.mxu0 %v226
      %695 = vmatpush1.bf16.msra.mxu0 %v225
      %696 = vmatprep.subr.bf16.mxu0 %v230
      %697 = vmatpush1.bf16.msra.mxu0 %v229
      %698 = vmatprep.subr.bf16.mxu0 %v234
      %699 = vmatpush1.bf16.msra.mxu0 %v233
      %700 = vmatprep.subr.bf16.mxu0 %v238
      %701 = vmatpush1.bf16.msra.mxu0 %v237
      %702 = vmatprep.subr.bf16.mxu0 0
      %703 = vmatpush1.bf16.msra.mxu0 0
      %704 = vmatprep.subr.bf16.mxu0 0
      %705 = vmatpush1.bf16.msra.mxu0 0
      %706 = vmatprep.subr.bf16.mxu0 0
      %707 = vmatpush1.bf16.msra.mxu0 0
      %708 = vmatprep.subr.bf16.mxu0 0
      %709 = vmatpush1.bf16.msra.mxu0 0
      %710 = vmatprep.subr.bf16.mxu0 0
      %711 = vmatpush1.bf16.msra.mxu0 0
      %712 = vmatprep.subr.bf16.mxu0 0
      %713 = vmatpush1.bf16.msra.mxu0 0
      %714 = vmatprep.subr.bf16.mxu0 0
      %715 = vmatpush1.bf16.msra.mxu0 0
      %716 = vmatprep.subr.bf16.mxu0 0
      %717 = vmatpush1.bf16.msra.mxu0 0
      %718 = vmatprep.mubr.bf16.mxu0 0
      %719 = vmatmul.mubr.bf16.gmra.mrb[0].mxu0 %v684
      %v720 = vpop.f32.mrb[0].mxu0
      %v721 = vadd.f32 0.0, %v720
      %v722 = vpop.f32.mrb[0].mxu0
      %v723 = vadd.f32 0.0, %v722
      %v724 = vpop.f32.mrb[0].mxu0
      %v725 = vpop.f32.mrb[0].mxu0
      %726 = vdwg.mxu0
      %727 = vmatprep.subr.bf16.mxu0 %v212
      %728 = vmatpush1.bf16.msra.mxu0 %v211
      %729 = vmatprep.subr.bf16.mxu0 %v216
      %730 = vmatpush1.bf16.msra.mxu0 %v215
      %731 = vmatprep.subr.bf16.mxu0 %v220
      %732 = vmatpush1.bf16.msra.mxu0 %v219
      %733 = vmatprep.subr.bf16.mxu0 %v224
      %734 = vmatpush1.bf16.msra.mxu0 %v223
      %735 = vmatprep.subr.bf16.mxu0 %v228
      %736 = vmatpush1.bf16.msra.mxu0 %v227
      %737 = vmatprep.subr.bf16.mxu0 %v232
      %738 = vmatpush1.bf16.msra.mxu0 %v231
      %739 = vmatprep.subr.bf16.mxu0 %v236
      %740 = vmatpush1.bf16.msra.mxu0 %v235
      %741 = vmatprep.subr.bf16.mxu0 %v240
      %742 = vmatpush1.bf16.msra.mxu0 %v239
      %743 = vmatprep.subr.bf16.mxu0 0
      %744 = vmatpush1.bf16.msra.mxu0 0
      %745 = vmatprep.subr.bf16.mxu0 0
      %746 = vmatpush1.bf16.msra.mxu0 0
      %747 = vmatprep.subr.bf16.mxu0 0
      %748 = vmatpush1.bf16.msra.mxu0 0
      %749 = vmatprep.subr.bf16.mxu0 0
      %750 = vmatpush1.bf16.msra.mxu0 0
      %751 = vmatprep.subr.bf16.mxu0 0
      %752 = vmatpush1.bf16.msra.mxu0 0
      %753 = vmatprep.subr.bf16.mxu0 0
      %754 = vmatpush1.bf16.msra.mxu0 0
      %755 = vmatprep.subr.bf16.mxu0 0
      %756 = vmatpush1.bf16.msra.mxu0 0
      %757 = vmatprep.subr.bf16.mxu0 0
      %758 = vmatpush1.bf16.msra.mxu0 0
      %759 = vmatprep.mubr.bf16.mxu0 0
      %760 = vmatmul.mubr.bf16.gmra.mrb[0].mxu0 %v684
      %v761 = vpop.f32.mrb[0].mxu0
      %v762 = vadd.f32 0.0, %v761
      %v763 = vpop.f32.mrb[0].mxu0
      %v764 = vadd.f32 0.0, %v763
      %v765 = vpop.f32.mrb[0].mxu0
      %v766 = vpop.f32.mrb[0].mxu0
      %767 = vdwg.mxu0
      %v772 = vrot.slane %v721, 2
      %v773 = vrot.slane %v723, 2
      %v774 = vrot.slane %v762, 2
      %v775 = vrot.slane %v764, 2
      %v780 = vadd.f32 %v678, %v772
      %v781 = vadd.f32 %v679, %v773
      %v782 = vadd.f32 %v680, %v774
      %v783 = vadd.f32 %v681, %v775
      %v784 = vxor.u32 %v780, 2147483648
      %v785 = vxor.u32 %v781, 2147483648
      %v786 = vxor.u32 %v782, 2147483648
      %v787 = vmul.f32 %v784, 1.442695
      %v788 = vpow.pop %v787
      %v789 = vmul.f32 %v785, 1.442695
      %v790 = vpow.pop %v789
      %v791 = vmul.f32 %v786, 1.442695
      %v792 = vpow.pop %v791
      %v793 = vadd.f32 %v788, 1.0
      %v794 = vadd.f32 %v790, 1.0
      %v795 = vadd.f32 %v792, 1.0
      %v796 = vrcp.pop %v793
      %v797 = vmul.f32 1.0, %v796
      %v798 = vrcp.pop %v794
      %v799 = vmul.f32 1.0, %v798
      %v800 = vrcp.pop %v795
      %v801 = vmul.f32 1.0, %v800
      %v802 = vtanh.pop %v783
      %v804 = vrot.slane %v663, 6
      %v806 = vmul.f32 %v799, %v804
      %v807 = vmul.f32 %v797, %v802
      %v808 = vadd.f32 %v806, %v807
      %v809 = vtanh.pop %v808
      %v810 = vmul.f32 %v801, %v809
      %s811 = sadd.s32 %s104, 3
      %v812 = vstv %s811
      %vm813 = vcmp.eq.s32.totalorder %v103, %v812
      %v814 = vsel %vm813, 1, 0
      %815 = vset.pattern.permute.xlu0 0
      %816 = vperm.xlu0 %815, %v814
      %v817 = vpop.permute.xlu0 %816
      %vm818 = vcmp.eq.s32.totalorder %v817, 1
      %v820 = vrot.slane %v810, 6
      %v822 = vsel %vm818, %v820, %v677
      %v823 = vld [vmem:[%s53 + $0x20] sm:$0x3]
      %v824 = vld [vmem:[%s53 + $0x28] sm:$0x3]
      %v825 = vld [vmem:[%s53 + $0x30] sm:$0x3]
      %v826 = vld [vmem:[%s53 + $0x38] sm:$0x3]
      %v827 = vpack.c.bf16 %v810, %v810
      %v829 = vrot.slane %v827, 3
      %831 = vmatprep.subr.bf16.mxu0 %v210
      %832 = vmatpush1.bf16.msra.mxu0 %v209
      %833 = vmatprep.subr.bf16.mxu0 %v214
      %834 = vmatpush1.bf16.msra.mxu0 %v213
      %835 = vmatprep.subr.bf16.mxu0 %v218
      %836 = vmatpush1.bf16.msra.mxu0 %v217
      %837 = vmatprep.subr.bf16.mxu0 %v222
      %838 = vmatpush1.bf16.msra.mxu0 %v221
      %839 = vmatprep.subr.bf16.mxu0 %v226
      %840 = vmatpush1.bf16.msra.mxu0 %v225
      %841 = vmatprep.subr.bf16.mxu0 %v230
      %842 = vmatpush1.bf16.msra.mxu0 %v229
      %843 = vmatprep.subr.bf16.mxu0 %v234
      %844 = vmatpush1.bf16.msra.mxu0 %v233
      %845 = vmatprep.subr.bf16.mxu0 %v238
      %846 = vmatpush1.bf16.msra.mxu0 %v237
      %847 = vmatprep.subr.bf16.mxu0 0
      %848 = vmatpush1.bf16.msra.mxu0 0
      %849 = vmatprep.subr.bf16.mxu0 0
      %850 = vmatpush1.bf16.msra.mxu0 0
      %851 = vmatprep.subr.bf16.mxu0 0
      %852 = vmatpush1.bf16.msra.mxu0 0
      %853 = vmatprep.subr.bf16.mxu0 0
      %854 = vmatpush1.bf16.msra.mxu0 0
      %855 = vmatprep.subr.bf16.mxu0 0
      %856 = vmatpush1.bf16.msra.mxu0 0
      %857 = vmatprep.subr.bf16.mxu0 0
      %858 = vmatpush1.bf16.msra.mxu0 0
      %859 = vmatprep.subr.bf16.mxu0 0
      %860 = vmatpush1.bf16.msra.mxu0 0
      %861 = vmatprep.subr.bf16.mxu0 0
      %862 = vmatpush1.bf16.msra.mxu0 0
      %863 = vmatprep.mubr.bf16.mxu0 0
      %864 = vmatmul.mubr.bf16.gmra.mrb[0].mxu0 %v829
      %v865 = vpop.f32.mrb[0].mxu0
      %v866 = vadd.f32 0.0, %v865
      %v867 = vpop.f32.mrb[0].mxu0
      %v868 = vadd.f32 0.0, %v867
      %v869 = vpop.f32.mrb[0].mxu0
      %v870 = vpop.f32.mrb[0].mxu0
      %871 = vdwg.mxu0
      %872 = vmatprep.subr.bf16.mxu0 %v212
      %873 = vmatpush1.bf16.msra.mxu0 %v211
      %874 = vmatprep.subr.bf16.mxu0 %v216
      %875 = vmatpush1.bf16.msra.mxu0 %v215
      %876 = vmatprep.subr.bf16.mxu0 %v220
      %877 = vmatpush1.bf16.msra.mxu0 %v219
      %878 = vmatprep.subr.bf16.mxu0 %v224
      %879 = vmatpush1.bf16.msra.mxu0 %v223
      %880 = vmatprep.subr.bf16.mxu0 %v228
      %881 = vmatpush1.bf16.msra.mxu0 %v227
      %882 = vmatprep.subr.bf16.mxu0 %v232
      %883 = vmatpush1.bf16.msra.mxu0 %v231
      %884 = vmatprep.subr.bf16.mxu0 %v236
      %885 = vmatpush1.bf16.msra.mxu0 %v235
      %886 = vmatprep.subr.bf16.mxu0 %v240
      %887 = vmatpush1.bf16.msra.mxu0 %v239
      %888 = vmatprep.subr.bf16.mxu0 0
      %889 = vmatpush1.bf16.msra.mxu0 0
      %890 = vmatprep.subr.bf16.mxu0 0
      %891 = vmatpush1.bf16.msra.mxu0 0
      %892 = vmatprep.subr.bf16.mxu0 0
      %893 = vmatpush1.bf16.msra.mxu0 0
      %894 = vmatprep.subr.bf16.mxu0 0
      %895 = vmatpush1.bf16.msra.mxu0 0
      %896 = vmatprep.subr.bf16.mxu0 0
      %897 = vmatpush1.bf16.msra.mxu0 0
      %898 = vmatprep.subr.bf16.mxu0 0
      %899 = vmatpush1.bf16.msra.mxu0 0
      %900 = vmatprep.subr.bf16.mxu0 0
      %901 = vmatpush1.bf16.msra.mxu0 0
      %902 = vmatprep.subr.bf16.mxu0 0
      %903 = vmatpush1.bf16.msra.mxu0 0
      %904 = vmatprep.mubr.bf16.mxu0 0
      %905 = vmatmul.mubr.bf16.gmra.mrb[0].mxu0 %v829
      %v906 = vpop.f32.mrb[0].mxu0
      %v907 = vadd.f32 0.0, %v906
      %v908 = vpop.f32.mrb[0].mxu0
      %v909 = vadd.f32 0.0, %v908
      %v910 = vpop.f32.mrb[0].mxu0
      %v911 = vpop.f32.mrb[0].mxu0
      %912 = vdwg.mxu0
      %v913 = vadd.f32 %v823, %v866
      %v914 = vadd.f32 %v824, %v868
      %v915 = vadd.f32 %v825, %v907
      %v916 = vadd.f32 %v826, %v909
      %v917 = vxor.u32 %v913, 2147483648
      %v918 = vxor.u32 %v914, 2147483648
      %v919 = vxor.u32 %v915, 2147483648
      %v920 = vmul.f32 %v917, 1.442695
      %v921 = vpow.pop %v920
      %v922 = vmul.f32 %v918, 1.442695
      %v923 = vpow.pop %v922
      %v924 = vmul.f32 %v919, 1.442695
      %v925 = vpow.pop %v924
      %v926 = vadd.f32 %v921, 1.0
      %v927 = vadd.f32 %v923, 1.0
      %v928 = vadd.f32 %v925, 1.0
      %v929 = vrcp.pop %v926
      %v930 = vmul.f32 1.0, %v929
      %v931 = vrcp.pop %v927
      %v932 = vmul.f32 1.0, %v931
      %v933 = vrcp.pop %v928
      %v934 = vmul.f32 1.0, %v933
      %v935 = vtanh.pop %v916
      %v937 = vrot.slane %v808, 6
      %v939 = vmul.f32 %v932, %v937
      %v940 = vmul.f32 %v930, %v935
      %v941 = vadd.f32 %v939, %v940
      %v942 = vtanh.pop %v941
      %v943 = vmul.f32 %v934, %v942
      %s944 = sadd.s32 %s104, 4
      %v945 = vstv %s944
      %vm946 = vcmp.eq.s32.totalorder %v103, %v945
      %v947 = vsel %vm946, 1, 0
      %948 = vset.pattern.permute.xlu0 0
      %949 = vperm.xlu0 %948, %v947
      %v950 = vpop.permute.xlu0 %949
      %vm951 = vcmp.eq.s32.totalorder %v950, 1
      %v952 = vsel %vm951, %v943, %v822
      %v953 = vld [vmem:[%s53 + $0x20] sm:$0xc]
      %v954 = vld [vmem:[%s53 + $0x28] sm:$0xc]
      %v955 = vld [vmem:[%s53 + $0x30] sm:$0xc]
      %v956 = vld [vmem:[%s53 + $0x38] sm:$0xc]
      %v957 = vpack.c.bf16 %v943, %v943
      %958 = vmatprep.subr.bf16.mxu0 %v210
      %959 = vmatpush1.bf16.msra.mxu0 %v209
      %960 = vmatprep.subr.bf16.mxu0 %v214
      %961 = vmatpush1.bf16.msra.mxu0 %v213
      %962 = vmatprep.subr.bf16.mxu0 %v218
      %963 = vmatpush1.bf16.msra.mxu0 %v217
      %964 = vmatprep.subr.bf16.mxu0 %v222
      %965 = vmatpush1.bf16.msra.mxu0 %v221
      %966 = vmatprep.subr.bf16.mxu0 %v226
      %967 = vmatpush1.bf16.msra.mxu0 %v225
      %968 = vmatprep.subr.bf16.mxu0 %v230
      %969 = vmatpush1.bf16.msra.mxu0 %v229
      %970 = vmatprep.subr.bf16.mxu0 %v234
      %971 = vmatpush1.bf16.msra.mxu0 %v233
      %972 = vmatprep.subr.bf16.mxu0 %v238
      %973 = vmatpush1.bf16.msra.mxu0 %v237
      %974 = vmatprep.subr.bf16.mxu0 0
      %975 = vmatpush1.bf16.msra.mxu0 0
      %976 = vmatprep.subr.bf16.mxu0 0
      %977 = vmatpush1.bf16.msra.mxu0 0
      %978 = vmatprep.subr.bf16.mxu0 0
      %979 = vmatpush1.bf16.msra.mxu0 0
      %980 = vmatprep.subr.bf16.mxu0 0
      %981 = vmatpush1.bf16.msra.mxu0 0
      %982 = vmatprep.subr.bf16.mxu0 0
      %983 = vmatpush1.bf16.msra.mxu0 0
      %984 = vmatprep.subr.bf16.mxu0 0
      %985 = vmatpush1.bf16.msra.mxu0 0
      %986 = vmatprep.subr.bf16.mxu0 0
      %987 = vmatpush1.bf16.msra.mxu0 0
      %988 = vmatprep.subr.bf16.mxu0 0
      %989 = vmatpush1.bf16.msra.mxu0 0
      %990 = vmatprep.mubr.bf16.mxu0 0
      %991 = vmatmul.mubr.bf16.gmra.mrb[0].mxu0 %v957
      %v992 = vpop.f32.mrb[0].mxu0
      %v993 = vadd.f32 0.0, %v992
      %v994 = vpop.f32.mrb[0].mxu0
      %v995 = vadd.f32 0.0, %v994
      %v996 = vpop.f32.mrb[0].mxu0
      %v997 = vpop.f32.mrb[0].mxu0
      %998 = vdwg.mxu0
      %999 = vmatprep.subr.bf16.mxu0 %v212
      %1000 = vmatpush1.bf16.msra.mxu0 %v211
      %1001 = vmatprep.subr.bf16.mxu0 %v216
      %1002 = vmatpush1.bf16.msra.mxu0 %v215
      %1003 = vmatprep.subr.bf16.mxu0 %v220
      %1004 = vmatpush1.bf16.msra.mxu0 %v219
      %1005 = vmatprep.subr.bf16.mxu0 %v224
      %1006 = vmatpush1.bf16.msra.mxu0 %v223
      %1007 = vmatprep.subr.bf16.mxu0 %v228
      %1008 = vmatpush1.bf16.msra.mxu0 %v227
      %1009 = vmatprep.subr.bf16.mxu0 %v232
      %1010 = vmatpush1.bf16.msra.mxu0 %v231
      %1011 = vmatprep.subr.bf16.mxu0 %v236
      %1012 = vmatpush1.bf16.msra.mxu0 %v235
      %1013 = vmatprep.subr.bf16.mxu0 %v240
      %1014 = vmatpush1.bf16.msra.mxu0 %v239
      %1015 = vmatprep.subr.bf16.mxu0 0
      %1016 = vmatpush1.bf16.msra.mxu0 0
      %1017 = vmatprep.subr.bf16.mxu0 0
      %1018 = vmatpush1.bf16.msra.mxu0 0
      %1019 = vmatprep.subr.bf16.mxu0 0
      %1020 = vmatpush1.bf16.msra.mxu0 0
      %1021 = vmatprep.subr.bf16.mxu0 0
      %1022 = vmatpush1.bf16.msra.mxu0 0
      %1023 = vmatprep.subr.bf16.mxu0 0
      %1024 = vmatpush1.bf16.msra.mxu0 0
      %1025 = vmatprep.subr.bf16.mxu0 0
      %1026 = vmatpush1.bf16.msra.mxu0 0
      %1027 = vmatprep.subr.bf16.mxu0 0
      %1028 = vmatpush1.bf16.msra.mxu0 0
      %1029 = vmatprep.subr.bf16.mxu0 0
      %1030 = vmatpush1.bf16.msra.mxu0 0
      %1031 = vmatprep.mubr.bf16.mxu0 0
      %1032 = vmatmul.mubr.bf16.gmra.mrb[0].mxu0 %v957
      %v1033 = vpop.f32.mrb[0].mxu0
      %v1034 = vadd.f32 0.0, %v1033
      %v1035 = vpop.f32.mrb[0].mxu0
      %v1036 = vadd.f32 0.0, %v1035
      %v1037 = vpop.f32.mrb[0].mxu0
      %v1038 = vpop.f32.mrb[0].mxu0
      %1039 = vdwg.mxu0
      %v1044 = vrot.slane %v993, 6
      %v1045 = vrot.slane %v995, 6
      %v1046 = vrot.slane %v1034, 6
      %v1047 = vrot.slane %v1036, 6
      %v1052 = vadd.f32 %v953, %v1044
      %v1053 = vadd.f32 %v954, %v1045
      %v1054 = vadd.f32 %v955, %v1046
      %v1055 = vadd.f32 %v956, %v1047
      %v1056 = vxor.u32 %v1052, 2147483648
      %v1057 = vxor.u32 %v1053, 2147483648
      %v1058 = vxor.u32 %v1054, 2147483648
      %v1059 = vmul.f32 %v1056, 1.442695
      %v1060 = vpow.pop %v1059
      %v1061 = vmul.f32 %v1057, 1.442695
      %v1062 = vpow.pop %v1061
      %v1063 = vmul.f32 %v1058, 1.442695
      %v1064 = vpow.pop %v1063
      %v1065 = vadd.f32 %v1060, 1.0
      %v1066 = vadd.f32 %v1062, 1.0
      %v1067 = vadd.f32 %v1064, 1.0
      %v1068 = vrcp.pop %v1065
      %v1069 = vmul.f32 1.0, %v1068
      %v1070 = vrcp.pop %v1066
      %v1071 = vmul.f32 1.0, %v1070
      %v1072 = vrcp.pop %v1067
      %v1073 = vmul.f32 1.0, %v1072
      %v1074 = vtanh.pop %v1055
      %v1076 = vrot.slane %v941, 6
      %v1078 = vmul.f32 %v1071, %v1076
      %v1079 = vmul.f32 %v1069, %v1074
      %v1080 = vadd.f32 %v1078, %v1079
      %v1081 = vtanh.pop %v1080
      %v1082 = vmul.f32 %v1073, %v1081
      %s1083 = sadd.s32 %s104, 5
      %v1084 = vstv %s1083
      %vm1085 = vcmp.eq.s32.totalorder %v103, %v1084
      %v1086 = vsel %vm1085, 1, 0
      %1087 = vset.pattern.permute.xlu0 0
      %1088 = vperm.xlu0 %1087, %v1086
      %v1089 = vpop.permute.xlu0 %1088
      %vm1090 = vcmp.eq.s32.totalorder %v1089, 1
      %v1092 = vrot.slane %v1082, 2
      %v1094 = vsel %vm1090, %v1092, %v952
      %v1095 = vld [vmem:[%s53 + $0x20] sm:$0x30]
      %v1096 = vld [vmem:[%s53 + $0x28] sm:$0x30]
      %v1097 = vld [vmem:[%s53 + $0x30] sm:$0x30]
      %v1098 = vld [vmem:[%s53 + $0x38] sm:$0x30]
      %v1099 = vpack.c.bf16 %v1082, %v1082
      %v1101 = vrot.slane %v1099, 1
      %1103 = vmatprep.subr.bf16.mxu0 %v210
      %1104 = vmatpush1.bf16.msra.mxu0 %v209
      %1105 = vmatprep.subr.bf16.mxu0 %v214
      %1106 = vmatpush1.bf16.msra.mxu0 %v213
      %1107 = vmatprep.subr.bf16.mxu0 %v218
      %1108 = vmatpush1.bf16.msra.mxu0 %v217
      %1109 = vmatprep.subr.bf16.mxu0 %v222
      %1110 = vmatpush1.bf16.msra.mxu0 %v221
      %1111 = vmatprep.subr.bf16.mxu0 %v226
      %1112 = vmatpush1.bf16.msra.mxu0 %v225
      %1113 = vmatprep.subr.bf16.mxu0 %v230
      %1114 = vmatpush1.bf16.msra.mxu0 %v229
      %1115 = vmatprep.subr.bf16.mxu0 %v234
      %1116 = vmatpush1.bf16.msra.mxu0 %v233
      %1117 = vmatprep.subr.bf16.mxu0 %v238
      %1118 = vmatpush1.bf16.msra.mxu0 %v237
      %1119 = vmatprep.subr.bf16.mxu0 0
      %1120 = vmatpush1.bf16.msra.mxu0 0
      %1121 = vmatprep.subr.bf16.mxu0 0
      %1122 = vmatpush1.bf16.msra.mxu0 0
      %1123 = vmatprep.subr.bf16.mxu0 0
      %1124 = vmatpush1.bf16.msra.mxu0 0
      %1125 = vmatprep.subr.bf16.mxu0 0
      %1126 = vmatpush1.bf16.msra.mxu0 0
      %1127 = vmatprep.subr.bf16.mxu0 0
      %1128 = vmatpush1.bf16.msra.mxu0 0
      %1129 = vmatprep.subr.bf16.mxu0 0
      %1130 = vmatpush1.bf16.msra.mxu0 0
      %1131 = vmatprep.subr.bf16.mxu0 0
      %1132 = vmatpush1.bf16.msra.mxu0 0
      %1133 = vmatprep.subr.bf16.mxu0 0
      %1134 = vmatpush1.bf16.msra.mxu0 0
      %1135 = vmatprep.mubr.bf16.mxu0 0
      %1136 = vmatmul.mubr.bf16.gmra.mrb[0].mxu0 %v1101
      %v1137 = vpop.f32.mrb[0].mxu0
      %v1138 = vadd.f32 0.0, %v1137
      %v1139 = vpop.f32.mrb[0].mxu0
      %v1140 = vadd.f32 0.0, %v1139
      %v1141 = vpop.f32.mrb[0].mxu0
      %v1142 = vpop.f32.mrb[0].mxu0
      %1143 = vdwg.mxu0
      %1144 = vmatprep.subr.bf16.mxu0 %v212
      %1145 = vmatpush1.bf16.msra.mxu0 %v211
      %1146 = vmatprep.subr.bf16.mxu0 %v216
      %1147 = vmatpush1.bf16.msra.mxu0 %v215
      %1148 = vmatprep.subr.bf16.mxu0 %v220
      %1149 = vmatpush1.bf16.msra.mxu0 %v219
      %1150 = vmatprep.subr.bf16.mxu0 %v224
      %1151 = vmatpush1.bf16.msra.mxu0 %v223
      %1152 = vmatprep.subr.bf16.mxu0 %v228
      %1153 = vmatpush1.bf16.msra.mxu0 %v227
      %1154 = vmatprep.subr.bf16.mxu0 %v232
      %1155 = vmatpush1.bf16.msra.mxu0 %v231
      %1156 = vmatprep.subr.bf16.mxu0 %v236
      %1157 = vmatpush1.bf16.msra.mxu0 %v235
      %1158 = vmatprep.subr.bf16.mxu0 %v240
      %1159 = vmatpush1.bf16.msra.mxu0 %v239
      %1160 = vmatprep.subr.bf16.mxu0 0
      %1161 = vmatpush1.bf16.msra.mxu0 0
      %1162 = vmatprep.subr.bf16.mxu0 0
      %1163 = vmatpush1.bf16.msra.mxu0 0
      %1164 = vmatprep.subr.bf16.mxu0 0
      %1165 = vmatpush1.bf16.msra.mxu0 0
      %1166 = vmatprep.subr.bf16.mxu0 0
      %1167 = vmatpush1.bf16.msra.mxu0 0
      %1168 = vmatprep.subr.bf16.mxu0 0
      %1169 = vmatpush1.bf16.msra.mxu0 0
      %1170 = vmatprep.subr.bf16.mxu0 0
      %1171 = vmatpush1.bf16.msra.mxu0 0
      %1172 = vmatprep.subr.bf16.mxu0 0
      %1173 = vmatpush1.bf16.msra.mxu0 0
      %1174 = vmatprep.subr.bf16.mxu0 0
      %1175 = vmatpush1.bf16.msra.mxu0 0
      %1176 = vmatprep.mubr.bf16.mxu0 0
      %1177 = vmatmul.mubr.bf16.gmra.mrb[0].mxu0 %v1101
      %v1178 = vpop.f32.mrb[0].mxu0
      %v1179 = vadd.f32 0.0, %v1178
      %v1180 = vpop.f32.mrb[0].mxu0
      %v1181 = vadd.f32 0.0, %v1180
      %v1182 = vpop.f32.mrb[0].mxu0
      %v1183 = vpop.f32.mrb[0].mxu0
      %1184 = vdwg.mxu0
      %v1189 = vrot.slane %v1138, 4
      %v1190 = vrot.slane %v1140, 4
      %v1191 = vrot.slane %v1179, 4
      %v1192 = vrot.slane %v1181, 4
      %v1197 = vadd.f32 %v1095, %v1189
      %v1198 = vadd.f32 %v1096, %v1190
      %v1199 = vadd.f32 %v1097, %v1191
      %v1200 = vadd.f32 %v1098, %v1192
      %v1201 = vxor.u32 %v1197, 2147483648
      %v1202 = vxor.u32 %v1198, 2147483648
      %v1203 = vxor.u32 %v1199, 2147483648
      %v1204 = vmul.f32 %v1201, 1.442695
      %v1205 = vpow.pop %v1204
      %v1206 = vmul.f32 %v1202, 1.442695
      %v1207 = vpow.pop %v1206
      %v1208 = vmul.f32 %v1203, 1.442695
      %v1209 = vpow.pop %v1208
      %v1210 = vadd.f32 %v1205, 1.0
      %v1211 = vadd.f32 %v1207, 1.0
      %v1212 = vadd.f32 %v1209, 1.0
      %v1213 = vrcp.pop %v1210
      %v1214 = vmul.f32 1.0, %v1213
      %v1215 = vrcp.pop %v1211
      %v1216 = vmul.f32 1.0, %v1215
      %v1217 = vrcp.pop %v1212
      %v1218 = vmul.f32 1.0, %v1217
      %v1219 = vtanh.pop %v1200
      %v1221 = vrot.slane %v1080, 6
      %v1223 = vmul.f32 %v1216, %v1221
      %v1224 = vmul.f32 %v1214, %v1219
      %v1225 = vadd.f32 %v1223, %v1224
      %v1226 = vtanh.pop %v1225
      %v1227 = vmul.f32 %v1218, %v1226
      %s1228 = sadd.s32 %s104, 6
      %v1229 = vstv %s1228
      %vm1230 = vcmp.eq.s32.totalorder %v103, %v1229
      %v1231 = vsel %vm1230, 1, 0
      %1232 = vset.pattern.permute.xlu0 0
      %1233 = vperm.xlu0 %1232, %v1231
      %v1234 = vpop.permute.xlu0 %1233
      %vm1235 = vcmp.eq.s32.totalorder %v1234, 1
      %v1237 = vrot.slane %v1227, 4
      %v1239 = vsel %vm1235, %v1237, %v1094
      %v1240 = vld [vmem:[%s53 + $0x20] sm:$0xc0]
      %v1241 = vld [vmem:[%s53 + $0x28] sm:$0xc0]
      %v1242 = vld [vmem:[%s53 + $0x30] sm:$0xc0]
      %v1243 = vld [vmem:[%s53 + $0x38] sm:$0xc0]
      %v1244 = vpack.c.bf16 %v1227, %v1227
      %v1246 = vrot.slane %v1244, 2
      %1248 = vmatprep.subr.bf16.mxu0 %v210
      %1249 = vmatpush1.bf16.msra.mxu0 %v209
      %1250 = vmatprep.subr.bf16.mxu0 %v214
      %1251 = vmatpush1.bf16.msra.mxu0 %v213
      %1252 = vmatprep.subr.bf16.mxu0 %v218
      %1253 = vmatpush1.bf16.msra.mxu0 %v217
      %1254 = vmatprep.subr.bf16.mxu0 %v222
      %1255 = vmatpush1.bf16.msra.mxu0 %v221
      %1256 = vmatprep.subr.bf16.mxu0 %v226
      %1257 = vmatpush1.bf16.msra.mxu0 %v225
      %1258 = vmatprep.subr.bf16.mxu0 %v230
      %1259 = vmatpush1.bf16.msra.mxu0 %v229
      %1260 = vmatprep.subr.bf16.mxu0 %v234
      %1261 = vmatpush1.bf16.msra.mxu0 %v233
      %1262 = vmatprep.subr.bf16.mxu0 %v238
      %1263 = vmatpush1.bf16.msra.mxu0 %v237
      %1264 = vmatprep.subr.bf16.mxu0 0
      %1265 = vmatpush1.bf16.msra.mxu0 0
      %1266 = vmatprep.subr.bf16.mxu0 0
      %1267 = vmatpush1.bf16.msra.mxu0 0
      %1268 = vmatprep.subr.bf16.mxu0 0
      %1269 = vmatpush1.bf16.msra.mxu0 0
      %1270 = vmatprep.subr.bf16.mxu0 0
      %1271 = vmatpush1.bf16.msra.mxu0 0
      %1272 = vmatprep.subr.bf16.mxu0 0
      %1273 = vmatpush1.bf16.msra.mxu0 0
      %1274 = vmatprep.subr.bf16.mxu0 0
      %1275 = vmatpush1.bf16.msra.mxu0 0
      %1276 = vmatprep.subr.bf16.mxu0 0
      %1277 = vmatpush1.bf16.msra.mxu0 0
      %1278 = vmatprep.subr.bf16.mxu0 0
      %1279 = vmatpush1.bf16.msra.mxu0 0
      %1280 = vmatprep.mubr.bf16.mxu0 0
      %1281 = vmatmul.mubr.bf16.gmra.mrb[0].mxu0 %v1246
      %v1282 = vpop.f32.mrb[0].mxu0
      %v1283 = vadd.f32 0.0, %v1282
      %v1284 = vpop.f32.mrb[0].mxu0
      %v1285 = vadd.f32 0.0, %v1284
      %v1286 = vpop.f32.mrb[0].mxu0
      %v1287 = vpop.f32.mrb[0].mxu0
      %1288 = vdwg.mxu0
      %1289 = vmatprep.subr.bf16.mxu0 %v212
      %1290 = vmatpush1.bf16.msra.mxu0 %v211
      %1291 = vmatprep.subr.bf16.mxu0 %v216
      %1292 = vmatpush1.bf16.msra.mxu0 %v215
      %1293 = vmatprep.subr.bf16.mxu0 %v220
      %1294 = vmatpush1.bf16.msra.mxu0 %v219
      %1295 = vmatprep.subr.bf16.mxu0 %v224
      %1296 = vmatpush1.bf16.msra.mxu0 %v223
      %1297 = vmatprep.subr.bf16.mxu0 %v228
      %1298 = vmatpush1.bf16.msra.mxu0 %v227
      %1299 = vmatprep.subr.bf16.mxu0 %v232
      %1300 = vmatpush1.bf16.msra.mxu0 %v231
      %1301 = vmatprep.subr.bf16.mxu0 %v236
      %1302 = vmatpush1.bf16.msra.mxu0 %v235
      %1303 = vmatprep.subr.bf16.mxu0 %v240
      %1304 = vmatpush1.bf16.msra.mxu0 %v239
      %1305 = vmatprep.subr.bf16.mxu0 0
      %1306 = vmatpush1.bf16.msra.mxu0 0
      %1307 = vmatprep.subr.bf16.mxu0 0
      %1308 = vmatpush1.bf16.msra.mxu0 0
      %1309 = vmatprep.subr.bf16.mxu0 0
      %1310 = vmatpush1.bf16.msra.mxu0 0
      %1311 = vmatprep.subr.bf16.mxu0 0
      %1312 = vmatpush1.bf16.msra.mxu0 0
      %1313 = vmatprep.subr.bf16.mxu0 0
      %1314 = vmatpush1.bf16.msra.mxu0 0
      %1315 = vmatprep.subr.bf16.mxu0 0
      %1316 = vmatpush1.bf16.msra.mxu0 0
      %1317 = vmatprep.subr.bf16.mxu0 0
      %1318 = vmatpush1.bf16.msra.mxu0 0
      %1319 = vmatprep.subr.bf16.mxu0 0
      %1320 = vmatpush1.bf16.msra.mxu0 0
      %1321 = vmatprep.mubr.bf16.mxu0 0
      %1322 = vmatmul.mubr.bf16.gmra.mrb[0].mxu0 %v1246
      %v1323 = vpop.f32.mrb[0].mxu0
      %v1324 = vadd.f32 0.0, %v1323
      %v1325 = vpop.f32.mrb[0].mxu0
      %v1326 = vadd.f32 0.0, %v1325
      %v1327 = vpop.f32.mrb[0].mxu0
      %v1328 = vpop.f32.mrb[0].mxu0
      %1329 = vdwg.mxu0
      %v1334 = vrot.slane %v1283, 2
      %v1335 = vrot.slane %v1285, 2
      %v1336 = vrot.slane %v1324, 2
      %v1337 = vrot.slane %v1326, 2
      %v1342 = vadd.f32 %v1240, %v1334
      %v1343 = vadd.f32 %v1241, %v1335
      %v1344 = vadd.f32 %v1242, %v1336
      %v1345 = vadd.f32 %v1243, %v1337
      %v1346 = vxor.u32 %v1342, 2147483648
      %v1347 = vxor.u32 %v1343, 2147483648
      %v1348 = vxor.u32 %v1344, 2147483648
      %v1349 = vmul.f32 %v1346, 1.442695
      %v1350 = vpow.pop %v1349
      %v1351 = vmul.f32 %v1347, 1.442695
      %v1352 = vpow.pop %v1351
      %v1353 = vmul.f32 %v1348, 1.442695
      %v1354 = vpow.pop %v1353
      %v1355 = vadd.f32 %v1350, 1.0
      %v1356 = vadd.f32 %v1352, 1.0
      %v1357 = vadd.f32 %v1354, 1.0
      %v1358 = vrcp.pop %v1355
      %v1359 = vmul.f32 1.0, %v1358
      %v1360 = vrcp.pop %v1356
      %v1361 = vmul.f32 1.0, %v1360
      %v1362 = vrcp.pop %v1357
      %v1363 = vmul.f32 1.0, %v1362
      %v1364 = vtanh.pop %v1345
      %v1366 = vrot.slane %v1225, 6
      %v1368 = vmul.f32 %v1361, %v1366
      %v1369 = vmul.f32 %v1359, %v1364
      %v1370 = vadd.f32 %v1368, %v1369
      %v1371 = vtanh.pop %v1370
      %v1372 = vmul.f32 %v1363, %v1371
      %s1373 = sadd.s32 %s104, 7
      %v1374 = vstv %s1373
      %vm1375 = vcmp.eq.s32.totalorder %v103, %v1374
      %v1376 = vsel %vm1375, 1, 0
      %1377 = vset.pattern.permute.xlu0 0
      %1378 = vperm.xlu0 %1377, %v1376
      %v1379 = vpop.permute.xlu0 %1378
      %vm1380 = vcmp.eq.s32.totalorder %v1379, 1
      %v1382 = vrot.slane %v1372, 6
      %v1384 = vsel %vm1380, %v1382, %v1239
      %1385 = vst [vmem:[#allocation2 - $0x6] sm:$0xc0] %v1372
      %1386 = vst [vmem:[#allocation3 - $0x6] sm:$0xc0] %v1370
      %1387 = vst [vmem:[#allocation4] sm:$0x3] %v1384
    $region29: #{predictor_forward.1} parent=1 // pred_fallthru
      _
    // Predicated region
    $region30: #{predictor_forward.1} parent=1 // pred_check
      %p1388 = pneg %p59
    $region31: #{predictor_forward.1} parent=1 // pred_check_branch
      %1390 = sbr.rel (%p1388) target = $region33
    $region32: #{predictor_forward.1} parent=1 // pred_region
      %v1391 = vld [vmem:[#allocation4] sm:$0x3]
      %v1392 = vld [vmem:[%s4] sm:$0xff]
      %v1393 = vld [vmem:[%s4 + $0x8] sm:$0xff]
      %v1394 = vld [vmem:[%s4 + $0x10] sm:$0xff]
      %v1395 = vld [vmem:[%s4 + $0x18] sm:$0xff]
      %v1396 = vld [vmem:[%s4 + $0x20] sm:$0xff]
      %v1397 = vld [vmem:[%s4 + $0x28] sm:$0xff]
      %v1398 = vld [vmem:[%s4 + $0x30] sm:$0xff]
      %v1399 = vld [vmem:[%s4 + $0x38] sm:$0xff]
      %v1400 = vld [vmem:[%s4 + $0x40] sm:$0xff]
      %v1401 = vld [vmem:[%s4 + $0x48] sm:$0xff]
      %v1402 = vld [vmem:[%s4 + $0x50] sm:$0xff]
      %v1403 = vld [vmem:[%s4 + $0x58] sm:$0xff]
      %v1404 = vld [vmem:[%s4 + $0x60] sm:$0xff]
      %v1405 = vld [vmem:[%s4 + $0x68] sm:$0xff]
      %v1406 = vld [vmem:[%s4 + $0x70] sm:$0xff]
      %v1407 = vld [vmem:[%s4 + $0x78] sm:$0xff]
      %v1408 = vld [vmem:[%s5] sm:$0x1]
      %v1410 = vlaneseq
      %v1411 = vshrl.u32 %v1410, 7
      %v1412 = vsub.s32 0, %v1411
      %v1413 = vrot.slane %v1408, %v1412
      %1415 = vmatprep.subr.mxu0 0.0
      %1416 = vmatpush1.msra.mxu0 %v1392
      %1417 = vmatprep.subr.mxu0 0.0
      %1418 = vmatpush1.msra.mxu0 %v1393
      %1419 = vmatprep.subr.mxu0 0.0
      %1420 = vmatpush1.msra.mxu0 %v1394
      %1421 = vmatprep.subr.mxu0 0.0
      %1422 = vmatpush1.msra.mxu0 %v1395
      %1423 = vmatprep.subr.mxu0 0.0
      %1424 = vmatpush1.msra.mxu0 %v1396
      %1425 = vmatprep.subr.mxu0 0.0
      %1426 = vmatpush1.msra.mxu0 %v1397
      %1427 = vmatprep.subr.mxu0 0.0
      %1428 = vmatpush1.msra.mxu0 %v1398
      %1429 = vmatprep.subr.mxu0 0.0
      %1430 = vmatpush1.msra.mxu0 %v1399
      %1431 = vmatprep.subr.mxu0 0.0
      %1432 = vmatpush1.msra.mxu0 %v1400
      %1433 = vmatprep.subr.mxu0 0.0
      %1434 = vmatpush1.msra.mxu0 %v1401
      %1435 = vmatprep.subr.mxu0 0.0
      %1436 = vmatpush1.msra.mxu0 %v1402
      %1437 = vmatprep.subr.mxu0 0.0
      %1438 = vmatpush1.msra.mxu0 %v1403
      %1439 = vmatprep.subr.mxu0 0.0
      %1440 = vmatpush1.msra.mxu0 %v1404
      %1441 = vmatprep.subr.mxu0 0.0
      %1442 = vmatpush1.msra.mxu0 %v1405
      %1443 = vmatprep.subr.mxu0 0.0
      %1444 = vmatpush1.msra.mxu0 %v1406
      %1445 = vmatprep.subr.mxu0 0.0
      %1446 = vmatpush1.msra.mxu0 %v1407
      %1447 = vmatprep.subr.mxu0 0.0
      %1448 = vmatpush1.msra.mxu0 0.0
      %1449 = vmatprep.subr.mxu0 0.0
      %1450 = vmatpush1.msra.mxu0 0.0
      %1451 = vmatprep.subr.mxu0 0.0
      %1452 = vmatpush1.msra.mxu0 0.0
      %1453 = vmatprep.subr.mxu0 0.0
      %1454 = vmatpush1.msra.mxu0 0.0
      %1455 = vmatprep.subr.mxu0 0.0
      %1456 = vmatpush1.msra.mxu0 0.0
      %1457 = vmatprep.subr.mxu0 0.0
      %1458 = vmatpush1.msra.mxu0 0.0
      %1459 = vmatprep.subr.mxu0 0.0
      %1460 = vmatpush1.msra.mxu0 0.0
      %1461 = vmatprep.subr.mxu0 0.0
      %1462 = vmatpush1.msra.mxu0 0.0
      %1463 = vmatprep.subr.mxu0 0.0
      %1464 = vmatpush1.msra.mxu0 0.0
      %1465 = vmatprep.subr.mxu0 0.0
      %1466 = vmatpush1.msra.mxu0 0.0
      %1467 = vmatprep.subr.mxu0 0.0
      %1468 = vmatpush1.msra.mxu0 0.0
      %1469 = vmatprep.subr.mxu0 0.0
      %1470 = vmatpush1.msra.mxu0 0.0
      %1471 = vmatprep.subr.mxu0 0.0
      %1472 = vmatpush1.msra.mxu0 0.0
      %1473 = vmatprep.subr.mxu0 0.0
      %1474 = vmatpush1.msra.mxu0 0.0
      %1475 = vmatprep.subr.mxu0 0.0
      %1476 = vmatpush1.msra.mxu0 0.0
      %1477 = vmatprep.subr.mxu0 0.0
      %1478 = vmatpush1.msra.mxu0 0.0
      %1479 = vmatprep.mubr.f32.mxu0 0.0
      %1480 = vmatmul.mubr.f32.gmra.mrb[0].mxu0 %v1391
      %v1481 = vpop.f32.mrb[0].mxu0
      %v1482 = vadd.f32 %v1413, %v1481
      %v1483 = vpop.f32.mrb[0].mxu0
      %1484 = vdwg.mxu0
      %1485 = vst [vmem:[#allocation7] sm:$0x3] %v1482
    $region33: #{predictor_forward.1} parent=1 // pred_fallthru
      _
    // Predicated region
    $region34: #{predictor_forward.1} parent=1 // pred_check
      _
    $region35: #{predictor_forward.1} parent=1 // pred_check_branch
      %1487 = sbr.rel (0) target = $region37
    $region36: #{predictor_forward.1} parent=1 // pred_region
      %s1489 = ssub.s32 32, 32
      %1490 = vsyncadd [#allocation8], %s1489
      %s1492 = sshll.u32 [#allocation7], 4
      %s1493 = int_to_ptr.vmem [resolvable:$true] %s1492
      %1495 = dma.vmem_to_hbm [thread:$0]  %s1493, 32, %s6, [#allocation8]
    $region37: #{predictor_forward.1} parent=1 // pred_fallthru
      _
    // Predicated region
    $region38: #{predictor_forward.1} parent=1 // pred_check
      _
    $region39: #{predictor_forward.1} parent=1 // pred_check_branch
      %1497 = sbr.rel (0) target = $region41
    $region40: #{predictor_forward.1} parent=1 // pred_region
      %1498 = dma.done [#allocation8], 32
    $region41: #{predictor_forward.1} parent=1 // pred_fallthru
      _
    %1499 = vsyncpa [#allocation8], 1

</llo_original>
